<compile_context>
chip_gen: v7x
topology: tpu7x:2x2x1
jax: 0.10.0
libtpu: 0.0.40
codegen_flags: <defaults>
</compile_context>

<pallas_src>
import jax
import jax.numpy as jnp
from jax.experimental import pallas as pl
from jax.experimental.pallas import tpu as pltpu

_IN_F = 7    # input features  (nn.Linear(7, 16))
_HID = 16    # hidden units
_CH = 8      # rows per chunk == one (8,128) vreg per feature slab


def _mlp_kernel(zt_ref, w1_ref, b1_ref, w2_ref, b2_ref, o_ref):
    # zt_ref: (7, ts, 128) f32 VMEM block, feature-major / lane-dense samples.
    # w1_ref: (7,16), b1_ref: (16,), w2_ref: (16,), b2_ref: (1,)  f32 SMEM.
    # o_ref : (ts, 128) f32 VMEM block.
    ts = o_ref.shape[0]
    n_chunks = ts // _CH

    # Hoist the 145 weight scalars out of the chunk loop (loop-invariant).
    w1 = [[w1_ref[j, k] for k in range(_HID)] for j in range(_IN_F)]
    b1 = [b1_ref[k] for k in range(_HID)]
    w2 = [w2_ref[k] for k in range(_HID)]
    b2 = b2_ref[0]

    def chunk(c, carry):
        off = pl.multiple_of(c * _CH, _CH)
        # Load the 7 feature slabs for this chunk exactly once (7 vregs live).
        z = [zt_ref[j, pl.ds(off, _CH), :] for j in range(_IN_F)]
        # Layer 1: 16 hidden accumulators; bias folded into the first madd.
        h = [z[0] * w1[0][k] + b1[k] for k in range(_HID)]
        for j in range(1, _IN_F):
            zj = z[j]
            for k in range(_HID):
                h[k] = h[k] + zj * w1[j][k]
        # ReLU + layer 2 as a scalar-operand weighted sum; b2 added once.
        out = jnp.maximum(h[0], 0.0) * w2[0]
        for k in range(1, _HID):
            out = out + jnp.maximum(h[k], 0.0) * w2[k]
        o_ref[pl.ds(off, _CH), :] = out + b2
        return carry

    unroll = 2 if (n_chunks % 2 == 0 and n_chunks >= 2) else 1
    jax.lax.fori_loop(0, n_chunks, chunk, None, unroll=unroll)


def _pick_tile(n, ts):
    """Row-tile (in 128-lane rows): multiple of 8, <= ts, and small enough that
    the grid gets >=2 steps when there is more than one minimal tile of data
    (keeps both v7x TensorCores busy)."""
    lane_rows = pl.cdiv(n, 128)
    two_step_cap = max(_CH, pl.cdiv(pl.cdiv(lane_rows, 2), _CH) * _CH)
    return max(_CH, min(ts, two_step_cap))


def _pallas_forward(zt, w1, b1, w2, b2, ts_eff):
    """zt: (7, rows, 128) f32 with rows % ts_eff == 0. Returns (rows, 128) f32."""
    rows = zt.shape[1]
    grid = (rows // ts_eff,)
    smem = lambda: pl.BlockSpec(memory_space=pltpu.MemorySpace.SMEM)
    n_samples = rows * 128
    return pl.pallas_call(
        _mlp_kernel,
        out_shape=jax.ShapeDtypeStruct((rows, 128), jnp.float32),
        grid_spec=pltpu.PrefetchScalarGridSpec(
            num_scalar_prefetch=0,
            grid=grid,
            in_specs=[
                pl.BlockSpec((_IN_F, ts_eff, 128), lambda i: (0, i, 0)),  # z tile
                smem(),  # w1 (7,16)  -- 145 scalars total live in SMEM
                smem(),  # b1 (16,)
                smem(),  # w2 (16,)
                smem(),  # b2 (1,)
            ],
            out_specs=pl.BlockSpec((ts_eff, 128), lambda i: (i, 0)),
        ),
        compiler_params=pltpu.CompilerParams(
            dimension_semantics=("parallel",),
            vmem_limit_bytes=32 * 1024 * 1024,
        ),
        cost_estimate=pl.CostEstimate(
            flops=int(n_samples) * (2 * _IN_F * _HID + 3 * _HID + 1),
            transcendentals=0,
            bytes_accessed=int(n_samples) * 4 * (_IN_F + 1),
        ),
    )(zt, w1, b1, w2, b2)


def _prep_params(params):
    w1 = params["w1"].reshape(_IN_F, _HID).astype(jnp.float32)
    b1 = params["b1"].reshape(_HID).astype(jnp.float32)
    w2 = params["w2"].reshape(_HID).astype(jnp.float32)
    b2 = params["b2"].reshape(1).astype(jnp.float32)
    return w1, b1, w2, b2


def latent_predictor_x8(z, params, *, ts=1024):
    """Forward pass of LatentPredictor_x8 for module-layout input.

    z: array of shape (..., 7), float32.  Returns (..., 1).
    Does one fused pad+transpose HBM pass to the lane-dense feature-major
    layout; use latent_predictor_x8_feature_major to skip it.
    """
    orig_shape = z.shape
    assert orig_shape[-1] == _IN_F, "last dim must be 7 (matches nn.Linear(7, 16))"
    z2d = z.reshape(-1, _IN_F).astype(jnp.float32)
    n = z2d.shape[0]

    ts_eff = _pick_tile(n, ts)
    blk = ts_eff * 128
    n_pad = pl.cdiv(n, blk) * blk
    rows = n_pad // 128

    if n_pad != n:
        z2d = jnp.pad(z2d, ((0, n_pad - n), (0, 0)))
    zt = z2d.T.reshape(_IN_F, rows, 128)          # feature-major, lane-dense

    w1, b1, w2, b2 = _prep_params(params)
    out = _pallas_forward(zt, w1, b1, w2, b2, ts_eff)

    out_flat = out.reshape(n_pad)
    if n_pad != n:
        out_flat = out_flat[:n]
    return out_flat.reshape(orig_shape[:-1] + (1,))


def latent_predictor_x8_feature_major(z_fm, params, *, ts=1024):
    """Zero-copy entry: z_fm has shape (7, N), feature-major. Returns (N,).
    No transpose is performed; only a tail pad when N % (ts_eff*128) != 0."""
    assert z_fm.shape[0] == _IN_F
    n = z_fm.shape[1]

    ts_eff = _pick_tile(n, ts)
    blk = ts_eff * 128
    n_pad = pl.cdiv(n, blk) * blk
    rows = n_pad // 128

    zf = z_fm.astype(jnp.float32)
    if n_pad != n:
        zf = jnp.pad(zf, ((0, 0), (0, n_pad - n)))
    zt = zf.reshape(_IN_F, rows, 128)             # pure reshape, no relayout

    w1, b1, w2, b2 = _prep_params(params)
    out = _pallas_forward(zt, w1, b1, w2, b2, ts_eff)

    out_flat = out.reshape(n_pad)
    return out_flat[:n] if n_pad != n else out_flat


def init_params(key):
    """Deterministic init matching nn.Linear(7,16) / nn.Linear(16,1) shapes."""
    k1, k2, k3, k4 = jax.random.split(key, 4)
    bound1 = 1.0 / jnp.sqrt(7.0)    # fan_in = 7
    bound2 = 1.0 / jnp.sqrt(16.0)   # fan_in = 16
    return {
        "w1": jax.random.uniform(k1, (_IN_F, _HID), jnp.float32, -bound1, bound1),
        "b1": jax.random.uniform(k2, (_HID,), jnp.float32, -bound1, bound1),
        "w2": jax.random.uniform(k3, (_HID, 1), jnp.float32, -bound2, bound2),
        "b2": jax.random.uniform(k4, (1,), jnp.float32, -bound2, bound2),
    }


def _ref_forward(z2d, params):
    h = jnp.maximum(z2d @ params["w1"] + params["b1"], 0.0)
    return h @ params["w2"] + params["b2"]


if __name__ == "__main__":
    key = jax.random.PRNGKey(0)
    k_param, k_small, k_big = jax.random.split(key, 3)
    params = init_params(k_param)

    # Small input consistent with the module: batch of 7-dim latents, (B, S, 7).
    z = jax.random.normal(k_small, (2, 8, _IN_F), jnp.float32)
    out = jax.block_until_ready(latent_predictor_x8(z, params))
    ref = _ref_forward(z.reshape(-1, _IN_F), params).reshape(z.shape[:-1] + (1,))
    assert out.shape == z.shape[:-1] + (1,)
    assert jnp.allclose(out, ref, atol=1e-5), "mismatch vs reference (small)"

    # Larger input: exercises multi-step grid, fori unroll and padded tail.
    z_big = jax.random.normal(k_big, (3000, _IN_F), jnp.float32)
    out_big = jax.block_until_ready(latent_predictor_x8(z_big, params))
    ref_big = _ref_forward(z_big, params)
    assert jnp.allclose(out_big, ref_big, atol=1e-5), "mismatch vs reference (big)"

    # Zero-copy feature-major entry point.
    out_fm = jax.block_until_ready(
        latent_predictor_x8_feature_major(z_big.T, params))
    assert jnp.allclose(out_fm, ref_big[:, 0], atol=1e-5), "mismatch vs reference (fm)"

    print("KERNEL_OK")
</pallas_src>

<mosaic_0001>
module attributes {stable_mosaic.version = 11 : i64} {
  func.func @_mlp_kernel(%arg0: i32, %arg1: memref<7x8x128xf32, #tpu.memory_space<vmem>>, %arg2: memref<7x16xf32, #tpu.memory_space<smem>>, %arg3: memref<16xf32, #tpu.memory_space<smem>>, %arg4: memref<16xf32, #tpu.memory_space<smem>>, %arg5: memref<1xf32, #tpu.memory_space<smem>>, %arg6: memref<8x128xf32, #tpu.memory_space<vmem>>) attributes {dimension_semantics = [#tpu.dimension_semantics<parallel>], iteration_bounds = array<i64: 1>, scalar_prefetch = 0 : i64, scratch_operands = 0 : i64, tpu.core_type = #tpu.core_type<tc>, window_params = [{transform_indices = @transform_0, window_bounds = array<i64: 7, 8, 128>}, {transform_indices = @transform_1, window_bounds = array<i64: 7, 16>}, {transform_indices = @transform_2, window_bounds = array<i64: 16>}, {transform_indices = @transform_3, window_bounds = array<i64: 16>}, {transform_indices = @transform_4, window_bounds = array<i64: 1>}, {transform_indices = @transform_5, window_bounds = array<i64: 8, 128>}]} {
    %c0 = arith.constant 0 : index
    %c0_0 = arith.constant 0 : index
    %0 = memref.load %arg2[%c0, %c0_0] : memref<7x16xf32, #tpu.memory_space<smem>>
    %c0_1 = arith.constant 0 : index
    %c1 = arith.constant 1 : index
    %1 = memref.load %arg2[%c0_1, %c1] : memref<7x16xf32, #tpu.memory_space<smem>>
    %c0_2 = arith.constant 0 : index
    %c2 = arith.constant 2 : index
    %2 = memref.load %arg2[%c0_2, %c2] : memref<7x16xf32, #tpu.memory_space<smem>>
    %c0_3 = arith.constant 0 : index
    %c3 = arith.constant 3 : index
    %3 = memref.load %arg2[%c0_3, %c3] : memref<7x16xf32, #tpu.memory_space<smem>>
    %c0_4 = arith.constant 0 : index
    %c4 = arith.constant 4 : index
    %4 = memref.load %arg2[%c0_4, %c4] : memref<7x16xf32, #tpu.memory_space<smem>>
    %c0_5 = arith.constant 0 : index
    %c5 = arith.constant 5 : index
    %5 = memref.load %arg2[%c0_5, %c5] : memref<7x16xf32, #tpu.memory_space<smem>>
    %c0_6 = arith.constant 0 : index
    %c6 = arith.constant 6 : index
    %6 = memref.load %arg2[%c0_6, %c6] : memref<7x16xf32, #tpu.memory_space<smem>>
    %c0_7 = arith.constant 0 : index
    %c7 = arith.constant 7 : index
    %7 = memref.load %arg2[%c0_7, %c7] : memref<7x16xf32, #tpu.memory_space<smem>>
    %c0_8 = arith.constant 0 : index
    %c8 = arith.constant 8 : index
    %8 = memref.load %arg2[%c0_8, %c8] : memref<7x16xf32, #tpu.memory_space<smem>>
    %c0_9 = arith.constant 0 : index
    %c9 = arith.constant 9 : index
    %9 = memref.load %arg2[%c0_9, %c9] : memref<7x16xf32, #tpu.memory_space<smem>>
    %c0_10 = arith.constant 0 : index
    %c10 = arith.constant 10 : index
    %10 = memref.load %arg2[%c0_10, %c10] : memref<7x16xf32, #tpu.memory_space<smem>>
    %c0_11 = arith.constant 0 : index
    %c11 = arith.constant 11 : index
    %11 = memref.load %arg2[%c0_11, %c11] : memref<7x16xf32, #tpu.memory_space<smem>>
    %c0_12 = arith.constant 0 : index
    %c12 = arith.constant 12 : index
    %12 = memref.load %arg2[%c0_12, %c12] : memref<7x16xf32, #tpu.memory_space<smem>>
    %c0_13 = arith.constant 0 : index
    %c13 = arith.constant 13 : index
    %13 = memref.load %arg2[%c0_13, %c13] : memref<7x16xf32, #tpu.memory_space<smem>>
    %c0_14 = arith.constant 0 : index
    %c14 = arith.constant 14 : index
    %14 = memref.load %arg2[%c0_14, %c14] : memref<7x16xf32, #tpu.memory_space<smem>>
    %c0_15 = arith.constant 0 : index
    %c15 = arith.constant 15 : index
    %15 = memref.load %arg2[%c0_15, %c15] : memref<7x16xf32, #tpu.memory_space<smem>>
    %c1_16 = arith.constant 1 : index
    %c0_17 = arith.constant 0 : index
    %16 = memref.load %arg2[%c1_16, %c0_17] : memref<7x16xf32, #tpu.memory_space<smem>>
    %c1_18 = arith.constant 1 : index
    %c1_19 = arith.constant 1 : index
    %17 = memref.load %arg2[%c1_18, %c1_19] : memref<7x16xf32, #tpu.memory_space<smem>>
    %c1_20 = arith.constant 1 : index
    %c2_21 = arith.constant 2 : index
    %18 = memref.load %arg2[%c1_20, %c2_21] : memref<7x16xf32, #tpu.memory_space<smem>>
    %c1_22 = arith.constant 1 : index
    %c3_23 = arith.constant 3 : index
    %19 = memref.load %arg2[%c1_22, %c3_23] : memref<7x16xf32, #tpu.memory_space<smem>>
    %c1_24 = arith.constant 1 : index
    %c4_25 = arith.constant 4 : index
    %20 = memref.load %arg2[%c1_24, %c4_25] : memref<7x16xf32, #tpu.memory_space<smem>>
    %c1_26 = arith.constant 1 : index
    %c5_27 = arith.constant 5 : index
    %21 = memref.load %arg2[%c1_26, %c5_27] : memref<7x16xf32, #tpu.memory_space<smem>>
    %c1_28 = arith.constant 1 : index
    %c6_29 = arith.constant 6 : index
    %22 = memref.load %arg2[%c1_28, %c6_29] : memref<7x16xf32, #tpu.memory_space<smem>>
    %c1_30 = arith.constant 1 : index
    %c7_31 = arith.constant 7 : index
    %23 = memref.load %arg2[%c1_30, %c7_31] : memref<7x16xf32, #tpu.memory_space<smem>>
    %c1_32 = arith.constant 1 : index
    %c8_33 = arith.constant 8 : index
    %24 = memref.load %arg2[%c1_32, %c8_33] : memref<7x16xf32, #tpu.memory_space<smem>>
    %c1_34 = arith.constant 1 : index
    %c9_35 = arith.constant 9 : index
    %25 = memref.load %arg2[%c1_34, %c9_35] : memref<7x16xf32, #tpu.memory_space<smem>>
    %c1_36 = arith.constant 1 : index
    %c10_37 = arith.constant 10 : index
    %26 = memref.load %arg2[%c1_36, %c10_37] : memref<7x16xf32, #tpu.memory_space<smem>>
    %c1_38 = arith.constant 1 : index
    %c11_39 = arith.constant 11 : index
    %27 = memref.load %arg2[%c1_38, %c11_39] : memref<7x16xf32, #tpu.memory_space<smem>>
    %c1_40 = arith.constant 1 : index
    %c12_41 = arith.constant 12 : index
    %28 = memref.load %arg2[%c1_40, %c12_41] : memref<7x16xf32, #tpu.memory_space<smem>>
    %c1_42 = arith.constant 1 : index
    %c13_43 = arith.constant 13 : index
    %29 = memref.load %arg2[%c1_42, %c13_43] : memref<7x16xf32, #tpu.memory_space<smem>>
    %c1_44 = arith.constant 1 : index
    %c14_45 = arith.constant 14 : index
    %30 = memref.load %arg2[%c1_44, %c14_45] : memref<7x16xf32, #tpu.memory_space<smem>>
    %c1_46 = arith.constant 1 : index
    %c15_47 = arith.constant 15 : index
    %31 = memref.load %arg2[%c1_46, %c15_47] : memref<7x16xf32, #tpu.memory_space<smem>>
    %c2_48 = arith.constant 2 : index
    %c0_49 = arith.constant 0 : index
    %32 = memref.load %arg2[%c2_48, %c0_49] : memref<7x16xf32, #tpu.memory_space<smem>>
    %c2_50 = arith.constant 2 : index
    %c1_51 = arith.constant 1 : index
    %33 = memref.load %arg2[%c2_50, %c1_51] : memref<7x16xf32, #tpu.memory_space<smem>>
    %c2_52 = arith.constant 2 : index
    %c2_53 = arith.constant 2 : index
    %34 = memref.load %arg2[%c2_52, %c2_53] : memref<7x16xf32, #tpu.memory_space<smem>>
    %c2_54 = arith.constant 2 : index
    %c3_55 = arith.constant 3 : index
    %35 = memref.load %arg2[%c2_54, %c3_55] : memref<7x16xf32, #tpu.memory_space<smem>>
    %c2_56 = arith.constant 2 : index
    %c4_57 = arith.constant 4 : index
    %36 = memref.load %arg2[%c2_56, %c4_57] : memref<7x16xf32, #tpu.memory_space<smem>>
    %c2_58 = arith.constant 2 : index
    %c5_59 = arith.constant 5 : index
    %37 = memref.load %arg2[%c2_58, %c5_59] : memref<7x16xf32, #tpu.memory_space<smem>>
    %c2_60 = arith.constant 2 : index
    %c6_61 = arith.constant 6 : index
    %38 = memref.load %arg2[%c2_60, %c6_61] : memref<7x16xf32, #tpu.memory_space<smem>>
    %c2_62 = arith.constant 2 : index
    %c7_63 = arith.constant 7 : index
    %39 = memref.load %arg2[%c2_62, %c7_63] : memref<7x16xf32, #tpu.memory_space<smem>>
    %c2_64 = arith.constant 2 : index
    %c8_65 = arith.constant 8 : index
    %40 = memref.load %arg2[%c2_64, %c8_65] : memref<7x16xf32, #tpu.memory_space<smem>>
    %c2_66 = arith.constant 2 : index
    %c9_67 = arith.constant 9 : index
    %41 = memref.load %arg2[%c2_66, %c9_67] : memref<7x16xf32, #tpu.memory_space<smem>>
    %c2_68 = arith.constant 2 : index
    %c10_69 = arith.constant 10 : index
    %42 = memref.load %arg2[%c2_68, %c10_69] : memref<7x16xf32, #tpu.memory_space<smem>>
    %c2_70 = arith.constant 2 : index
    %c11_71 = arith.constant 11 : index
    %43 = memref.load %arg2[%c2_70, %c11_71] : memref<7x16xf32, #tpu.memory_space<smem>>
    %c2_72 = arith.constant 2 : index
    %c12_73 = arith.constant 12 : index
    %44 = memref.load %arg2[%c2_72, %c12_73] : memref<7x16xf32, #tpu.memory_space<smem>>
    %c2_74 = arith.constant 2 : index
    %c13_75 = arith.constant 13 : index
    %45 = memref.load %arg2[%c2_74, %c13_75] : memref<7x16xf32, #tpu.memory_space<smem>>
    %c2_76 = arith.constant 2 : index
    %c14_77 = arith.constant 14 : index
    %46 = memref.load %arg2[%c2_76, %c14_77] : memref<7x16xf32, #tpu.memory_space<smem>>
    %c2_78 = arith.constant 2 : index
    %c15_79 = arith.constant 15 : index
    %47 = memref.load %arg2[%c2_78, %c15_79] : memref<7x16xf32, #tpu.memory_space<smem>>
    %c3_80 = arith.constant 3 : index
    %c0_81 = arith.constant 0 : index
    %48 = memref.load %arg2[%c3_80, %c0_81] : memref<7x16xf32, #tpu.memory_space<smem>>
    %c3_82 = arith.constant 3 : index
    %c1_83 = arith.constant 1 : index
    %49 = memref.load %arg2[%c3_82, %c1_83] : memref<7x16xf32, #tpu.memory_space<smem>>
    %c3_84 = arith.constant 3 : index
    %c2_85 = arith.constant 2 : index
    %50 = memref.load %arg2[%c3_84, %c2_85] : memref<7x16xf32, #tpu.memory_space<smem>>
    %c3_86 = arith.constant 3 : index
    %c3_87 = arith.constant 3 : index
    %51 = memref.load %arg2[%c3_86, %c3_87] : memref<7x16xf32, #tpu.memory_space<smem>>
    %c3_88 = arith.constant 3 : index
    %c4_89 = arith.constant 4 : index
    %52 = memref.load %arg2[%c3_88, %c4_89] : memref<7x16xf32, #tpu.memory_space<smem>>
    %c3_90 = arith.constant 3 : index
    %c5_91 = arith.constant 5 : index
    %53 = memref.load %arg2[%c3_90, %c5_91] : memref<7x16xf32, #tpu.memory_space<smem>>
    %c3_92 = arith.constant 3 : index
    %c6_93 = arith.constant 6 : index
    %54 = memref.load %arg2[%c3_92, %c6_93] : memref<7x16xf32, #tpu.memory_space<smem>>
    %c3_94 = arith.constant 3 : index
    %c7_95 = arith.constant 7 : index
    %55 = memref.load %arg2[%c3_94, %c7_95] : memref<7x16xf32, #tpu.memory_space<smem>>
    %c3_96 = arith.constant 3 : index
    %c8_97 = arith.constant 8 : index
    %56 = memref.load %arg2[%c3_96, %c8_97] : memref<7x16xf32, #tpu.memory_space<smem>>
    %c3_98 = arith.constant 3 : index
    %c9_99 = arith.constant 9 : index
    %57 = memref.load %arg2[%c3_98, %c9_99] : memref<7x16xf32, #tpu.memory_space<smem>>
    %c3_100 = arith.constant 3 : index
    %c10_101 = arith.constant 10 : index
    %58 = memref.load %arg2[%c3_100, %c10_101] : memref<7x16xf32, #tpu.memory_space<smem>>
    %c3_102 = arith.constant 3 : index
    %c11_103 = arith.constant 11 : index
    %59 = memref.load %arg2[%c3_102, %c11_103] : memref<7x16xf32, #tpu.memory_space<smem>>
    %c3_104 = arith.constant 3 : index
    %c12_105 = arith.constant 12 : index
    %60 = memref.load %arg2[%c3_104, %c12_105] : memref<7x16xf32, #tpu.memory_space<smem>>
    %c3_106 = arith.constant 3 : index
    %c13_107 = arith.constant 13 : index
    %61 = memref.load %arg2[%c3_106, %c13_107] : memref<7x16xf32, #tpu.memory_space<smem>>
    %c3_108 = arith.constant 3 : index
    %c14_109 = arith.constant 14 : index
    %62 = memref.load %arg2[%c3_108, %c14_109] : memref<7x16xf32, #tpu.memory_space<smem>>
    %c3_110 = arith.constant 3 : index
    %c15_111 = arith.constant 15 : index
    %63 = memref.load %arg2[%c3_110, %c15_111] : memref<7x16xf32, #tpu.memory_space<smem>>
    %c4_112 = arith.constant 4 : index
    %c0_113 = arith.constant 0 : index
    %64 = memref.load %arg2[%c4_112, %c0_113] : memref<7x16xf32, #tpu.memory_space<smem>>
    %c4_114 = arith.constant 4 : index
    %c1_115 = arith.constant 1 : index
    %65 = memref.load %arg2[%c4_114, %c1_115] : memref<7x16xf32, #tpu.memory_space<smem>>
    %c4_116 = arith.constant 4 : index
    %c2_117 = arith.constant 2 : index
    %66 = memref.load %arg2[%c4_116, %c2_117] : memref<7x16xf32, #tpu.memory_space<smem>>
    %c4_118 = arith.constant 4 : index
    %c3_119 = arith.constant 3 : index
    %67 = memref.load %arg2[%c4_118, %c3_119] : memref<7x16xf32, #tpu.memory_space<smem>>
    %c4_120 = arith.constant 4 : index
    %c4_121 = arith.constant 4 : index
    %68 = memref.load %arg2[%c4_120, %c4_121] : memref<7x16xf32, #tpu.memory_space<smem>>
    %c4_122 = arith.constant 4 : index
    %c5_123 = arith.constant 5 : index
    %69 = memref.load %arg2[%c4_122, %c5_123] : memref<7x16xf32, #tpu.memory_space<smem>>
    %c4_124 = arith.constant 4 : index
    %c6_125 = arith.constant 6 : index
    %70 = memref.load %arg2[%c4_124, %c6_125] : memref<7x16xf32, #tpu.memory_space<smem>>
    %c4_126 = arith.constant 4 : index
    %c7_127 = arith.constant 7 : index
    %71 = memref.load %arg2[%c4_126, %c7_127] : memref<7x16xf32, #tpu.memory_space<smem>>
    %c4_128 = arith.constant 4 : index
    %c8_129 = arith.constant 8 : index
    %72 = memref.load %arg2[%c4_128, %c8_129] : memref<7x16xf32, #tpu.memory_space<smem>>
    %c4_130 = arith.constant 4 : index
    %c9_131 = arith.constant 9 : index
    %73 = memref.load %arg2[%c4_130, %c9_131] : memref<7x16xf32, #tpu.memory_space<smem>>
    %c4_132 = arith.constant 4 : index
    %c10_133 = arith.constant 10 : index
    %74 = memref.load %arg2[%c4_132, %c10_133] : memref<7x16xf32, #tpu.memory_space<smem>>
    %c4_134 = arith.constant 4 : index
    %c11_135 = arith.constant 11 : index
    %75 = memref.load %arg2[%c4_134, %c11_135] : memref<7x16xf32, #tpu.memory_space<smem>>
    %c4_136 = arith.constant 4 : index
    %c12_137 = arith.constant 12 : index
    %76 = memref.load %arg2[%c4_136, %c12_137] : memref<7x16xf32, #tpu.memory_space<smem>>
    %c4_138 = arith.constant 4 : index
    %c13_139 = arith.constant 13 : index
    %77 = memref.load %arg2[%c4_138, %c13_139] : memref<7x16xf32, #tpu.memory_space<smem>>
    %c4_140 = arith.constant 4 : index
    %c14_141 = arith.constant 14 : index
    %78 = memref.load %arg2[%c4_140, %c14_141] : memref<7x16xf32, #tpu.memory_space<smem>>
    %c4_142 = arith.constant 4 : index
    %c15_143 = arith.constant 15 : index
    %79 = memref.load %arg2[%c4_142, %c15_143] : memref<7x16xf32, #tpu.memory_space<smem>>
    %c5_144 = arith.constant 5 : index
    %c0_145 = arith.constant 0 : index
    %80 = memref.load %arg2[%c5_144, %c0_145] : memref<7x16xf32, #tpu.memory_space<smem>>
    %c5_146 = arith.constant 5 : index
    %c1_147 = arith.constant 1 : index
    %81 = memref.load %arg2[%c5_146, %c1_147] : memref<7x16xf32, #tpu.memory_space<smem>>
    %c5_148 = arith.constant 5 : index
    %c2_149 = arith.constant 2 : index
    %82 = memref.load %arg2[%c5_148, %c2_149] : memref<7x16xf32, #tpu.memory_space<smem>>
    %c5_150 = arith.constant 5 : index
    %c3_151 = arith.constant 3 : index
    %83 = memref.load %arg2[%c5_150, %c3_151] : memref<7x16xf32, #tpu.memory_space<smem>>
    %c5_152 = arith.constant 5 : index
    %c4_153 = arith.constant 4 : index
    %84 = memref.load %arg2[%c5_152, %c4_153] : memref<7x16xf32, #tpu.memory_space<smem>>
    %c5_154 = arith.constant 5 : index
    %c5_155 = arith.constant 5 : index
    %85 = memref.load %arg2[%c5_154, %c5_155] : memref<7x16xf32, #tpu.memory_space<smem>>
    %c5_156 = arith.constant 5 : index
    %c6_157 = arith.constant 6 : index
    %86 = memref.load %arg2[%c5_156, %c6_157] : memref<7x16xf32, #tpu.memory_space<smem>>
    %c5_158 = arith.constant 5 : index
    %c7_159 = arith.constant 7 : index
    %87 = memref.load %arg2[%c5_158, %c7_159] : memref<7x16xf32, #tpu.memory_space<smem>>
    %c5_160 = arith.constant 5 : index
    %c8_161 = arith.constant 8 : index
    %88 = memref.load %arg2[%c5_160, %c8_161] : memref<7x16xf32, #tpu.memory_space<smem>>
    %c5_162 = arith.constant 5 : index
    %c9_163 = arith.constant 9 : index
    %89 = memref.load %arg2[%c5_162, %c9_163] : memref<7x16xf32, #tpu.memory_space<smem>>
    %c5_164 = arith.constant 5 : index
    %c10_165 = arith.constant 10 : index
    %90 = memref.load %arg2[%c5_164, %c10_165] : memref<7x16xf32, #tpu.memory_space<smem>>
    %c5_166 = arith.constant 5 : index
    %c11_167 = arith.constant 11 : index
    %91 = memref.load %arg2[%c5_166, %c11_167] : memref<7x16xf32, #tpu.memory_space<smem>>
    %c5_168 = arith.constant 5 : index
    %c12_169 = arith.constant 12 : index
    %92 = memref.load %arg2[%c5_168, %c12_169] : memref<7x16xf32, #tpu.memory_space<smem>>
    %c5_170 = arith.constant 5 : index
    %c13_171 = arith.constant 13 : index
    %93 = memref.load %arg2[%c5_170, %c13_171] : memref<7x16xf32, #tpu.memory_space<smem>>
    %c5_172 = arith.constant 5 : index
    %c14_173 = arith.constant 14 : index
    %94 = memref.load %arg2[%c5_172, %c14_173] : memref<7x16xf32, #tpu.memory_space<smem>>
    %c5_174 = arith.constant 5 : index
    %c15_175 = arith.constant 15 : index
    %95 = memref.load %arg2[%c5_174, %c15_175] : memref<7x16xf32, #tpu.memory_space<smem>>
    %c6_176 = arith.constant 6 : index
    %c0_177 = arith.constant 0 : index
    %96 = memref.load %arg2[%c6_176, %c0_177] : memref<7x16xf32, #tpu.memory_space<smem>>
    %c6_178 = arith.constant 6 : index
    %c1_179 = arith.constant 1 : index
    %97 = memref.load %arg2[%c6_178, %c1_179] : memref<7x16xf32, #tpu.memory_space<smem>>
    %c6_180 = arith.constant 6 : index
    %c2_181 = arith.constant 2 : index
    %98 = memref.load %arg2[%c6_180, %c2_181] : memref<7x16xf32, #tpu.memory_space<smem>>
    %c6_182 = arith.constant 6 : index
    %c3_183 = arith.constant 3 : index
    %99 = memref.load %arg2[%c6_182, %c3_183] : memref<7x16xf32, #tpu.memory_space<smem>>
    %c6_184 = arith.constant 6 : index
    %c4_185 = arith.constant 4 : index
    %100 = memref.load %arg2[%c6_184, %c4_185] : memref<7x16xf32, #tpu.memory_space<smem>>
    %c6_186 = arith.constant 6 : index
    %c5_187 = arith.constant 5 : index
    %101 = memref.load %arg2[%c6_186, %c5_187] : memref<7x16xf32, #tpu.memory_space<smem>>
    %c6_188 = arith.constant 6 : index
    %c6_189 = arith.constant 6 : index
    %102 = memref.load %arg2[%c6_188, %c6_189] : memref<7x16xf32, #tpu.memory_space<smem>>
    %c6_190 = arith.constant 6 : index
    %c7_191 = arith.constant 7 : index
    %103 = memref.load %arg2[%c6_190, %c7_191] : memref<7x16xf32, #tpu.memory_space<smem>>
    %c6_192 = arith.constant 6 : index
    %c8_193 = arith.constant 8 : index
    %104 = memref.load %arg2[%c6_192, %c8_193] : memref<7x16xf32, #tpu.memory_space<smem>>
    %c6_194 = arith.constant 6 : index
    %c9_195 = arith.constant 9 : index
    %105 = memref.load %arg2[%c6_194, %c9_195] : memref<7x16xf32, #tpu.memory_space<smem>>
    %c6_196 = arith.constant 6 : index
    %c10_197 = arith.constant 10 : index
    %106 = memref.load %arg2[%c6_196, %c10_197] : memref<7x16xf32, #tpu.memory_space<smem>>
    %c6_198 = arith.constant 6 : index
    %c11_199 = arith.constant 11 : index
    %107 = memref.load %arg2[%c6_198, %c11_199] : memref<7x16xf32, #tpu.memory_space<smem>>
    %c6_200 = arith.constant 6 : index
    %c12_201 = arith.constant 12 : index
    %108 = memref.load %arg2[%c6_200, %c12_201] : memref<7x16xf32, #tpu.memory_space<smem>>
    %c6_202 = arith.constant 6 : index
    %c13_203 = arith.constant 13 : index
    %109 = memref.load %arg2[%c6_202, %c13_203] : memref<7x16xf32, #tpu.memory_space<smem>>
    %c6_204 = arith.constant 6 : index
    %c14_205 = arith.constant 14 : index
    %110 = memref.load %arg2[%c6_204, %c14_205] : memref<7x16xf32, #tpu.memory_space<smem>>
    %c6_206 = arith.constant 6 : index
    %c15_207 = arith.constant 15 : index
    %111 = memref.load %arg2[%c6_206, %c15_207] : memref<7x16xf32, #tpu.memory_space<smem>>
    %c0_208 = arith.constant 0 : index
    %112 = memref.load %arg3[%c0_208] : memref<16xf32, #tpu.memory_space<smem>>
    %c1_209 = arith.constant 1 : index
    %113 = memref.load %arg3[%c1_209] : memref<16xf32, #tpu.memory_space<smem>>
    %c2_210 = arith.constant 2 : index
    %114 = memref.load %arg3[%c2_210] : memref<16xf32, #tpu.memory_space<smem>>
    %c3_211 = arith.constant 3 : index
    %115 = memref.load %arg3[%c3_211] : memref<16xf32, #tpu.memory_space<smem>>
    %c4_212 = arith.constant 4 : index
    %116 = memref.load %arg3[%c4_212] : memref<16xf32, #tpu.memory_space<smem>>
    %c5_213 = arith.constant 5 : index
    %117 = memref.load %arg3[%c5_213] : memref<16xf32, #tpu.memory_space<smem>>
    %c6_214 = arith.constant 6 : index
    %118 = memref.load %arg3[%c6_214] : memref<16xf32, #tpu.memory_space<smem>>
    %c7_215 = arith.constant 7 : index
    %119 = memref.load %arg3[%c7_215] : memref<16xf32, #tpu.memory_space<smem>>
    %c8_216 = arith.constant 8 : index
    %120 = memref.load %arg3[%c8_216] : memref<16xf32, #tpu.memory_space<smem>>
    %c9_217 = arith.constant 9 : index
    %121 = memref.load %arg3[%c9_217] : memref<16xf32, #tpu.memory_space<smem>>
    %c10_218 = arith.constant 10 : index
    %122 = memref.load %arg3[%c10_218] : memref<16xf32, #tpu.memory_space<smem>>
    %c11_219 = arith.constant 11 : index
    %123 = memref.load %arg3[%c11_219] : memref<16xf32, #tpu.memory_space<smem>>
    %c12_220 = arith.constant 12 : index
    %124 = memref.load %arg3[%c12_220] : memref<16xf32, #tpu.memory_space<smem>>
    %c13_221 = arith.constant 13 : index
    %125 = memref.load %arg3[%c13_221] : memref<16xf32, #tpu.memory_space<smem>>
    %c14_222 = arith.constant 14 : index
    %126 = memref.load %arg3[%c14_222] : memref<16xf32, #tpu.memory_space<smem>>
    %c15_223 = arith.constant 15 : index
    %127 = memref.load %arg3[%c15_223] : memref<16xf32, #tpu.memory_space<smem>>
    %c0_224 = arith.constant 0 : index
    %128 = memref.load %arg4[%c0_224] : memref<16xf32, #tpu.memory_space<smem>>
    %c1_225 = arith.constant 1 : index
    %129 = memref.load %arg4[%c1_225] : memref<16xf32, #tpu.memory_space<smem>>
    %c2_226 = arith.constant 2 : index
    %130 = memref.load %arg4[%c2_226] : memref<16xf32, #tpu.memory_space<smem>>
    %c3_227 = arith.constant 3 : index
    %131 = memref.load %arg4[%c3_227] : memref<16xf32, #tpu.memory_space<smem>>
    %c4_228 = arith.constant 4 : index
    %132 = memref.load %arg4[%c4_228] : memref<16xf32, #tpu.memory_space<smem>>
    %c5_229 = arith.constant 5 : index
    %133 = memref.load %arg4[%c5_229] : memref<16xf32, #tpu.memory_space<smem>>
    %c6_230 = arith.constant 6 : index
    %134 = memref.load %arg4[%c6_230] : memref<16xf32, #tpu.memory_space<smem>>
    %c7_231 = arith.constant 7 : index
    %135 = memref.load %arg4[%c7_231] : memref<16xf32, #tpu.memory_space<smem>>
    %c8_232 = arith.constant 8 : index
    %136 = memref.load %arg4[%c8_232] : memref<16xf32, #tpu.memory_space<smem>>
    %c9_233 = arith.constant 9 : index
    %137 = memref.load %arg4[%c9_233] : memref<16xf32, #tpu.memory_space<smem>>
    %c10_234 = arith.constant 10 : index
    %138 = memref.load %arg4[%c10_234] : memref<16xf32, #tpu.memory_space<smem>>
    %c11_235 = arith.constant 11 : index
    %139 = memref.load %arg4[%c11_235] : memref<16xf32, #tpu.memory_space<smem>>
    %c12_236 = arith.constant 12 : index
    %140 = memref.load %arg4[%c12_236] : memref<16xf32, #tpu.memory_space<smem>>
    %c13_237 = arith.constant 13 : index
    %141 = memref.load %arg4[%c13_237] : memref<16xf32, #tpu.memory_space<smem>>
    %c14_238 = arith.constant 14 : index
    %142 = memref.load %arg4[%c14_238] : memref<16xf32, #tpu.memory_space<smem>>
    %c15_239 = arith.constant 15 : index
    %143 = memref.load %arg4[%c15_239] : memref<16xf32, #tpu.memory_space<smem>>
    %c0_240 = arith.constant 0 : index
    %144 = memref.load %arg5[%c0_240] : memref<1xf32, #tpu.memory_space<smem>>
    %c0_i32 = arith.constant 0 : i32
    %c8_i32 = arith.constant 8 : i32
    %145 = arith.muli %c0_i32, %c8_i32 : i32
    %146 = tpu.assume_multiple %145, 8 : i32
    %c0_241 = arith.constant 0 : index
    %147 = arith.index_cast %146 : i32 to index
    %c0_242 = arith.constant 0 : index
    %148 = vector.load %arg1[%c0_241, %147, %c0_242] : memref<7x8x128xf32, #tpu.memory_space<vmem>>, vector<1x8x128xf32>
    %149 = vector.shape_cast %148 : vector<1x8x128xf32> to vector<8x128xf32>
    %c1_243 = arith.constant 1 : index
    %150 = arith.index_cast %146 : i32 to index
    %c0_244 = arith.constant 0 : index
    %151 = vector.load %arg1[%c1_243, %150, %c0_244] : memref<7x8x128xf32, #tpu.memory_space<vmem>>, vector<1x8x128xf32>
    %152 = vector.shape_cast %151 : vector<1x8x128xf32> to vector<8x128xf32>
    %c2_245 = arith.constant 2 : index
    %153 = arith.index_cast %146 : i32 to index
    %c0_246 = arith.constant 0 : index
    %154 = vector.load %arg1[%c2_245, %153, %c0_246] : memref<7x8x128xf32, #tpu.memory_space<vmem>>, vector<1x8x128xf32>
    %155 = vector.shape_cast %154 : vector<1x8x128xf32> to vector<8x128xf32>
    %c3_247 = arith.constant 3 : index
    %156 = arith.index_cast %146 : i32 to index
    %c0_248 = arith.constant 0 : index
    %157 = vector.load %arg1[%c3_247, %156, %c0_248] : memref<7x8x128xf32, #tpu.memory_space<vmem>>, vector<1x8x128xf32>
    %158 = vector.shape_cast %157 : vector<1x8x128xf32> to vector<8x128xf32>
    %c4_249 = arith.constant 4 : index
    %159 = arith.index_cast %146 : i32 to index
    %c0_250 = arith.constant 0 : index
    %160 = vector.load %arg1[%c4_249, %159, %c0_250] : memref<7x8x128xf32, #tpu.memory_space<vmem>>, vector<1x8x128xf32>
    %161 = vector.shape_cast %160 : vector<1x8x128xf32> to vector<8x128xf32>
    %c5_251 = arith.constant 5 : index
    %162 = arith.index_cast %146 : i32 to index
    %c0_252 = arith.constant 0 : index
    %163 = vector.load %arg1[%c5_251, %162, %c0_252] : memref<7x8x128xf32, #tpu.memory_space<vmem>>, vector<1x8x128xf32>
    %164 = vector.shape_cast %163 : vector<1x8x128xf32> to vector<8x128xf32>
    %c6_253 = arith.constant 6 : index
    %165 = arith.index_cast %146 : i32 to index
    %c0_254 = arith.constant 0 : index
    %166 = vector.load %arg1[%c6_253, %165, %c0_254] : memref<7x8x128xf32, #tpu.memory_space<vmem>>, vector<1x8x128xf32>
    %167 = vector.shape_cast %166 : vector<1x8x128xf32> to vector<8x128xf32>
    %168 = vector.broadcast %0 : f32 to vector<8x128xf32>
    %169 = arith.mulf %149, %168 : vector<8x128xf32>
    %170 = vector.broadcast %112 : f32 to vector<8x128xf32>
    %171 = arith.addf %169, %170 : vector<8x128xf32>
    %172 = vector.broadcast %1 : f32 to vector<8x128xf32>
    %173 = arith.mulf %149, %172 : vector<8x128xf32>
    %174 = vector.broadcast %113 : f32 to vector<8x128xf32>
    %175 = arith.addf %173, %174 : vector<8x128xf32>
    %176 = vector.broadcast %2 : f32 to vector<8x128xf32>
    %177 = arith.mulf %149, %176 : vector<8x128xf32>
    %178 = vector.broadcast %114 : f32 to vector<8x128xf32>
    %179 = arith.addf %177, %178 : vector<8x128xf32>
    %180 = vector.broadcast %3 : f32 to vector<8x128xf32>
    %181 = arith.mulf %149, %180 : vector<8x128xf32>
    %182 = vector.broadcast %115 : f32 to vector<8x128xf32>
    %183 = arith.addf %181, %182 : vector<8x128xf32>
    %184 = vector.broadcast %4 : f32 to vector<8x128xf32>
    %185 = arith.mulf %149, %184 : vector<8x128xf32>
    %186 = vector.broadcast %116 : f32 to vector<8x128xf32>
    %187 = arith.addf %185, %186 : vector<8x128xf32>
    %188 = vector.broadcast %5 : f32 to vector<8x128xf32>
    %189 = arith.mulf %149, %188 : vector<8x128xf32>
    %190 = vector.broadcast %117 : f32 to vector<8x128xf32>
    %191 = arith.addf %189, %190 : vector<8x128xf32>
    %192 = vector.broadcast %6 : f32 to vector<8x128xf32>
    %193 = arith.mulf %149, %192 : vector<8x128xf32>
    %194 = vector.broadcast %118 : f32 to vector<8x128xf32>
    %195 = arith.addf %193, %194 : vector<8x128xf32>
    %196 = vector.broadcast %7 : f32 to vector<8x128xf32>
    %197 = arith.mulf %149, %196 : vector<8x128xf32>
    %198 = vector.broadcast %119 : f32 to vector<8x128xf32>
    %199 = arith.addf %197, %198 : vector<8x128xf32>
    %200 = vector.broadcast %8 : f32 to vector<8x128xf32>
    %201 = arith.mulf %149, %200 : vector<8x128xf32>
    %202 = vector.broadcast %120 : f32 to vector<8x128xf32>
    %203 = arith.addf %201, %202 : vector<8x128xf32>
    %204 = vector.broadcast %9 : f32 to vector<8x128xf32>
    %205 = arith.mulf %149, %204 : vector<8x128xf32>
    %206 = vector.broadcast %121 : f32 to vector<8x128xf32>
    %207 = arith.addf %205, %206 : vector<8x128xf32>
    %208 = vector.broadcast %10 : f32 to vector<8x128xf32>
    %209 = arith.mulf %149, %208 : vector<8x128xf32>
    %210 = vector.broadcast %122 : f32 to vector<8x128xf32>
    %211 = arith.addf %209, %210 : vector<8x128xf32>
    %212 = vector.broadcast %11 : f32 to vector<8x128xf32>
    %213 = arith.mulf %149, %212 : vector<8x128xf32>
    %214 = vector.broadcast %123 : f32 to vector<8x128xf32>
    %215 = arith.addf %213, %214 : vector<8x128xf32>
    %216 = vector.broadcast %12 : f32 to vector<8x128xf32>
    %217 = arith.mulf %149, %216 : vector<8x128xf32>
    %218 = vector.broadcast %124 : f32 to vector<8x128xf32>
    %219 = arith.addf %217, %218 : vector<8x128xf32>
    %220 = vector.broadcast %13 : f32 to vector<8x128xf32>
    %221 = arith.mulf %149, %220 : vector<8x128xf32>
    %222 = vector.broadcast %125 : f32 to vector<8x128xf32>
    %223 = arith.addf %221, %222 : vector<8x128xf32>
    %224 = vector.broadcast %14 : f32 to vector<8x128xf32>
    %225 = arith.mulf %149, %224 : vector<8x128xf32>
    %226 = vector.broadcast %126 : f32 to vector<8x128xf32>
    %227 = arith.addf %225, %226 : vector<8x128xf32>
    %228 = vector.broadcast %15 : f32 to vector<8x128xf32>
    %229 = arith.mulf %149, %228 : vector<8x128xf32>
    %230 = vector.broadcast %127 : f32 to vector<8x128xf32>
    %231 = arith.addf %229, %230 : vector<8x128xf32>
    %232 = vector.broadcast %16 : f32 to vector<8x128xf32>
    %233 = arith.mulf %152, %232 : vector<8x128xf32>
    %234 = arith.addf %171, %233 : vector<8x128xf32>
    %235 = vector.broadcast %17 : f32 to vector<8x128xf32>
    %236 = arith.mulf %152, %235 : vector<8x128xf32>
    %237 = arith.addf %175, %236 : vector<8x128xf32>
    %238 = vector.broadcast %18 : f32 to vector<8x128xf32>
    %239 = arith.mulf %152, %238 : vector<8x128xf32>
    %240 = arith.addf %179, %239 : vector<8x128xf32>
    %241 = vector.broadcast %19 : f32 to vector<8x128xf32>
    %242 = arith.mulf %152, %241 : vector<8x128xf32>
    %243 = arith.addf %183, %242 : vector<8x128xf32>
    %244 = vector.broadcast %20 : f32 to vector<8x128xf32>
    %245 = arith.mulf %152, %244 : vector<8x128xf32>
    %246 = arith.addf %187, %245 : vector<8x128xf32>
    %247 = vector.broadcast %21 : f32 to vector<8x128xf32>
    %248 = arith.mulf %152, %247 : vector<8x128xf32>
    %249 = arith.addf %191, %248 : vector<8x128xf32>
    %250 = vector.broadcast %22 : f32 to vector<8x128xf32>
    %251 = arith.mulf %152, %250 : vector<8x128xf32>
    %252 = arith.addf %195, %251 : vector<8x128xf32>
    %253 = vector.broadcast %23 : f32 to vector<8x128xf32>
    %254 = arith.mulf %152, %253 : vector<8x128xf32>
    %255 = arith.addf %199, %254 : vector<8x128xf32>
    %256 = vector.broadcast %24 : f32 to vector<8x128xf32>
    %257 = arith.mulf %152, %256 : vector<8x128xf32>
    %258 = arith.addf %203, %257 : vector<8x128xf32>
    %259 = vector.broadcast %25 : f32 to vector<8x128xf32>
    %260 = arith.mulf %152, %259 : vector<8x128xf32>
    %261 = arith.addf %207, %260 : vector<8x128xf32>
    %262 = vector.broadcast %26 : f32 to vector<8x128xf32>
    %263 = arith.mulf %152, %262 : vector<8x128xf32>
    %264 = arith.addf %211, %263 : vector<8x128xf32>
    %265 = vector.broadcast %27 : f32 to vector<8x128xf32>
    %266 = arith.mulf %152, %265 : vector<8x128xf32>
    %267 = arith.addf %215, %266 : vector<8x128xf32>
    %268 = vector.broadcast %28 : f32 to vector<8x128xf32>
    %269 = arith.mulf %152, %268 : vector<8x128xf32>
    %270 = arith.addf %219, %269 : vector<8x128xf32>
    %271 = vector.broadcast %29 : f32 to vector<8x128xf32>
    %272 = arith.mulf %152, %271 : vector<8x128xf32>
    %273 = arith.addf %223, %272 : vector<8x128xf32>
    %274 = vector.broadcast %30 : f32 to vector<8x128xf32>
    %275 = arith.mulf %152, %274 : vector<8x128xf32>
    %276 = arith.addf %227, %275 : vector<8x128xf32>
    %277 = vector.broadcast %31 : f32 to vector<8x128xf32>
    %278 = arith.mulf %152, %277 : vector<8x128xf32>
    %279 = arith.addf %231, %278 : vector<8x128xf32>
    %280 = vector.broadcast %32 : f32 to vector<8x128xf32>
    %281 = arith.mulf %155, %280 : vector<8x128xf32>
    %282 = arith.addf %234, %281 : vector<8x128xf32>
    %283 = vector.broadcast %33 : f32 to vector<8x128xf32>
    %284 = arith.mulf %155, %283 : vector<8x128xf32>
    %285 = arith.addf %237, %284 : vector<8x128xf32>
    %286 = vector.broadcast %34 : f32 to vector<8x128xf32>
    %287 = arith.mulf %155, %286 : vector<8x128xf32>
    %288 = arith.addf %240, %287 : vector<8x128xf32>
    %289 = vector.broadcast %35 : f32 to vector<8x128xf32>
    %290 = arith.mulf %155, %289 : vector<8x128xf32>
    %291 = arith.addf %243, %290 : vector<8x128xf32>
    %292 = vector.broadcast %36 : f32 to vector<8x128xf32>
    %293 = arith.mulf %155, %292 : vector<8x128xf32>
    %294 = arith.addf %246, %293 : vector<8x128xf32>
    %295 = vector.broadcast %37 : f32 to vector<8x128xf32>
    %296 = arith.mulf %155, %295 : vector<8x128xf32>
    %297 = arith.addf %249, %296 : vector<8x128xf32>
    %298 = vector.broadcast %38 : f32 to vector<8x128xf32>
    %299 = arith.mulf %155, %298 : vector<8x128xf32>
    %300 = arith.addf %252, %299 : vector<8x128xf32>
    %301 = vector.broadcast %39 : f32 to vector<8x128xf32>
    %302 = arith.mulf %155, %301 : vector<8x128xf32>
    %303 = arith.addf %255, %302 : vector<8x128xf32>
    %304 = vector.broadcast %40 : f32 to vector<8x128xf32>
    %305 = arith.mulf %155, %304 : vector<8x128xf32>
    %306 = arith.addf %258, %305 : vector<8x128xf32>
    %307 = vector.broadcast %41 : f32 to vector<8x128xf32>
    %308 = arith.mulf %155, %307 : vector<8x128xf32>
    %309 = arith.addf %261, %308 : vector<8x128xf32>
    %310 = vector.broadcast %42 : f32 to vector<8x128xf32>
    %311 = arith.mulf %155, %310 : vector<8x128xf32>
    %312 = arith.addf %264, %311 : vector<8x128xf32>
    %313 = vector.broadcast %43 : f32 to vector<8x128xf32>
    %314 = arith.mulf %155, %313 : vector<8x128xf32>
    %315 = arith.addf %267, %314 : vector<8x128xf32>
    %316 = vector.broadcast %44 : f32 to vector<8x128xf32>
    %317 = arith.mulf %155, %316 : vector<8x128xf32>
    %318 = arith.addf %270, %317 : vector<8x128xf32>
    %319 = vector.broadcast %45 : f32 to vector<8x128xf32>
    %320 = arith.mulf %155, %319 : vector<8x128xf32>
    %321 = arith.addf %273, %320 : vector<8x128xf32>
    %322 = vector.broadcast %46 : f32 to vector<8x128xf32>
    %323 = arith.mulf %155, %322 : vector<8x128xf32>
    %324 = arith.addf %276, %323 : vector<8x128xf32>
    %325 = vector.broadcast %47 : f32 to vector<8x128xf32>
    %326 = arith.mulf %155, %325 : vector<8x128xf32>
    %327 = arith.addf %279, %326 : vector<8x128xf32>
    %328 = vector.broadcast %48 : f32 to vector<8x128xf32>
    %329 = arith.mulf %158, %328 : vector<8x128xf32>
    %330 = arith.addf %282, %329 : vector<8x128xf32>
    %331 = vector.broadcast %49 : f32 to vector<8x128xf32>
    %332 = arith.mulf %158, %331 : vector<8x128xf32>
    %333 = arith.addf %285, %332 : vector<8x128xf32>
    %334 = vector.broadcast %50 : f32 to vector<8x128xf32>
    %335 = arith.mulf %158, %334 : vector<8x128xf32>
    %336 = arith.addf %288, %335 : vector<8x128xf32>
    %337 = vector.broadcast %51 : f32 to vector<8x128xf32>
    %338 = arith.mulf %158, %337 : vector<8x128xf32>
    %339 = arith.addf %291, %338 : vector<8x128xf32>
    %340 = vector.broadcast %52 : f32 to vector<8x128xf32>
    %341 = arith.mulf %158, %340 : vector<8x128xf32>
    %342 = arith.addf %294, %341 : vector<8x128xf32>
    %343 = vector.broadcast %53 : f32 to vector<8x128xf32>
    %344 = arith.mulf %158, %343 : vector<8x128xf32>
    %345 = arith.addf %297, %344 : vector<8x128xf32>
    %346 = vector.broadcast %54 : f32 to vector<8x128xf32>
    %347 = arith.mulf %158, %346 : vector<8x128xf32>
    %348 = arith.addf %300, %347 : vector<8x128xf32>
    %349 = vector.broadcast %55 : f32 to vector<8x128xf32>
    %350 = arith.mulf %158, %349 : vector<8x128xf32>
    %351 = arith.addf %303, %350 : vector<8x128xf32>
    %352 = vector.broadcast %56 : f32 to vector<8x128xf32>
    %353 = arith.mulf %158, %352 : vector<8x128xf32>
    %354 = arith.addf %306, %353 : vector<8x128xf32>
    %355 = vector.broadcast %57 : f32 to vector<8x128xf32>
    %356 = arith.mulf %158, %355 : vector<8x128xf32>
    %357 = arith.addf %309, %356 : vector<8x128xf32>
    %358 = vector.broadcast %58 : f32 to vector<8x128xf32>
    %359 = arith.mulf %158, %358 : vector<8x128xf32>
    %360 = arith.addf %312, %359 : vector<8x128xf32>
    %361 = vector.broadcast %59 : f32 to vector<8x128xf32>
    %362 = arith.mulf %158, %361 : vector<8x128xf32>
    %363 = arith.addf %315, %362 : vector<8x128xf32>
    %364 = vector.broadcast %60 : f32 to vector<8x128xf32>
    %365 = arith.mulf %158, %364 : vector<8x128xf32>
    %366 = arith.addf %318, %365 : vector<8x128xf32>
    %367 = vector.broadcast %61 : f32 to vector<8x128xf32>
    %368 = arith.mulf %158, %367 : vector<8x128xf32>
    %369 = arith.addf %321, %368 : vector<8x128xf32>
    %370 = vector.broadcast %62 : f32 to vector<8x128xf32>
    %371 = arith.mulf %158, %370 : vector<8x128xf32>
    %372 = arith.addf %324, %371 : vector<8x128xf32>
    %373 = vector.broadcast %63 : f32 to vector<8x128xf32>
    %374 = arith.mulf %158, %373 : vector<8x128xf32>
    %375 = arith.addf %327, %374 : vector<8x128xf32>
    %376 = vector.broadcast %64 : f32 to vector<8x128xf32>
    %377 = arith.mulf %161, %376 : vector<8x128xf32>
    %378 = arith.addf %330, %377 : vector<8x128xf32>
    %379 = vector.broadcast %65 : f32 to vector<8x128xf32>
    %380 = arith.mulf %161, %379 : vector<8x128xf32>
    %381 = arith.addf %333, %380 : vector<8x128xf32>
    %382 = vector.broadcast %66 : f32 to vector<8x128xf32>
    %383 = arith.mulf %161, %382 : vector<8x128xf32>
    %384 = arith.addf %336, %383 : vector<8x128xf32>
    %385 = vector.broadcast %67 : f32 to vector<8x128xf32>
    %386 = arith.mulf %161, %385 : vector<8x128xf32>
    %387 = arith.addf %339, %386 : vector<8x128xf32>
    %388 = vector.broadcast %68 : f32 to vector<8x128xf32>
    %389 = arith.mulf %161, %388 : vector<8x128xf32>
    %390 = arith.addf %342, %389 : vector<8x128xf32>
    %391 = vector.broadcast %69 : f32 to vector<8x128xf32>
    %392 = arith.mulf %161, %391 : vector<8x128xf32>
    %393 = arith.addf %345, %392 : vector<8x128xf32>
    %394 = vector.broadcast %70 : f32 to vector<8x128xf32>
    %395 = arith.mulf %161, %394 : vector<8x128xf32>
    %396 = arith.addf %348, %395 : vector<8x128xf32>
    %397 = vector.broadcast %71 : f32 to vector<8x128xf32>
    %398 = arith.mulf %161, %397 : vector<8x128xf32>
    %399 = arith.addf %351, %398 : vector<8x128xf32>
    %400 = vector.broadcast %72 : f32 to vector<8x128xf32>
    %401 = arith.mulf %161, %400 : vector<8x128xf32>
    %402 = arith.addf %354, %401 : vector<8x128xf32>
    %403 = vector.broadcast %73 : f32 to vector<8x128xf32>
    %404 = arith.mulf %161, %403 : vector<8x128xf32>
    %405 = arith.addf %357, %404 : vector<8x128xf32>
    %406 = vector.broadcast %74 : f32 to vector<8x128xf32>
    %407 = arith.mulf %161, %406 : vector<8x128xf32>
    %408 = arith.addf %360, %407 : vector<8x128xf32>
    %409 = vector.broadcast %75 : f32 to vector<8x128xf32>
    %410 = arith.mulf %161, %409 : vector<8x128xf32>
    %411 = arith.addf %363, %410 : vector<8x128xf32>
    %412 = vector.broadcast %76 : f32 to vector<8x128xf32>
    %413 = arith.mulf %161, %412 : vector<8x128xf32>
    %414 = arith.addf %366, %413 : vector<8x128xf32>
    %415 = vector.broadcast %77 : f32 to vector<8x128xf32>
    %416 = arith.mulf %161, %415 : vector<8x128xf32>
    %417 = arith.addf %369, %416 : vector<8x128xf32>
    %418 = vector.broadcast %78 : f32 to vector<8x128xf32>
    %419 = arith.mulf %161, %418 : vector<8x128xf32>
    %420 = arith.addf %372, %419 : vector<8x128xf32>
    %421 = vector.broadcast %79 : f32 to vector<8x128xf32>
    %422 = arith.mulf %161, %421 : vector<8x128xf32>
    %423 = arith.addf %375, %422 : vector<8x128xf32>
    %424 = vector.broadcast %80 : f32 to vector<8x128xf32>
    %425 = arith.mulf %164, %424 : vector<8x128xf32>
    %426 = arith.addf %378, %425 : vector<8x128xf32>
    %427 = vector.broadcast %81 : f32 to vector<8x128xf32>
    %428 = arith.mulf %164, %427 : vector<8x128xf32>
    %429 = arith.addf %381, %428 : vector<8x128xf32>
    %430 = vector.broadcast %82 : f32 to vector<8x128xf32>
    %431 = arith.mulf %164, %430 : vector<8x128xf32>
    %432 = arith.addf %384, %431 : vector<8x128xf32>
    %433 = vector.broadcast %83 : f32 to vector<8x128xf32>
    %434 = arith.mulf %164, %433 : vector<8x128xf32>
    %435 = arith.addf %387, %434 : vector<8x128xf32>
    %436 = vector.broadcast %84 : f32 to vector<8x128xf32>
    %437 = arith.mulf %164, %436 : vector<8x128xf32>
    %438 = arith.addf %390, %437 : vector<8x128xf32>
    %439 = vector.broadcast %85 : f32 to vector<8x128xf32>
    %440 = arith.mulf %164, %439 : vector<8x128xf32>
    %441 = arith.addf %393, %440 : vector<8x128xf32>
    %442 = vector.broadcast %86 : f32 to vector<8x128xf32>
    %443 = arith.mulf %164, %442 : vector<8x128xf32>
    %444 = arith.addf %396, %443 : vector<8x128xf32>
    %445 = vector.broadcast %87 : f32 to vector<8x128xf32>
    %446 = arith.mulf %164, %445 : vector<8x128xf32>
    %447 = arith.addf %399, %446 : vector<8x128xf32>
    %448 = vector.broadcast %88 : f32 to vector<8x128xf32>
    %449 = arith.mulf %164, %448 : vector<8x128xf32>
    %450 = arith.addf %402, %449 : vector<8x128xf32>
    %451 = vector.broadcast %89 : f32 to vector<8x128xf32>
    %452 = arith.mulf %164, %451 : vector<8x128xf32>
    %453 = arith.addf %405, %452 : vector<8x128xf32>
    %454 = vector.broadcast %90 : f32 to vector<8x128xf32>
    %455 = arith.mulf %164, %454 : vector<8x128xf32>
    %456 = arith.addf %408, %455 : vector<8x128xf32>
    %457 = vector.broadcast %91 : f32 to vector<8x128xf32>
    %458 = arith.mulf %164, %457 : vector<8x128xf32>
    %459 = arith.addf %411, %458 : vector<8x128xf32>
    %460 = vector.broadcast %92 : f32 to vector<8x128xf32>
    %461 = arith.mulf %164, %460 : vector<8x128xf32>
    %462 = arith.addf %414, %461 : vector<8x128xf32>
    %463 = vector.broadcast %93 : f32 to vector<8x128xf32>
    %464 = arith.mulf %164, %463 : vector<8x128xf32>
    %465 = arith.addf %417, %464 : vector<8x128xf32>
    %466 = vector.broadcast %94 : f32 to vector<8x128xf32>
    %467 = arith.mulf %164, %466 : vector<8x128xf32>
    %468 = arith.addf %420, %467 : vector<8x128xf32>
    %469 = vector.broadcast %95 : f32 to vector<8x128xf32>
    %470 = arith.mulf %164, %469 : vector<8x128xf32>
    %471 = arith.addf %423, %470 : vector<8x128xf32>
    %472 = vector.broadcast %96 : f32 to vector<8x128xf32>
    %473 = arith.mulf %167, %472 : vector<8x128xf32>
    %474 = arith.addf %426, %473 : vector<8x128xf32>
    %475 = vector.broadcast %97 : f32 to vector<8x128xf32>
    %476 = arith.mulf %167, %475 : vector<8x128xf32>
    %477 = arith.addf %429, %476 : vector<8x128xf32>
    %478 = vector.broadcast %98 : f32 to vector<8x128xf32>
    %479 = arith.mulf %167, %478 : vector<8x128xf32>
    %480 = arith.addf %432, %479 : vector<8x128xf32>
    %481 = vector.broadcast %99 : f32 to vector<8x128xf32>
    %482 = arith.mulf %167, %481 : vector<8x128xf32>
    %483 = arith.addf %435, %482 : vector<8x128xf32>
    %484 = vector.broadcast %100 : f32 to vector<8x128xf32>
    %485 = arith.mulf %167, %484 : vector<8x128xf32>
    %486 = arith.addf %438, %485 : vector<8x128xf32>
    %487 = vector.broadcast %101 : f32 to vector<8x128xf32>
    %488 = arith.mulf %167, %487 : vector<8x128xf32>
    %489 = arith.addf %441, %488 : vector<8x128xf32>
    %490 = vector.broadcast %102 : f32 to vector<8x128xf32>
    %491 = arith.mulf %167, %490 : vector<8x128xf32>
    %492 = arith.addf %444, %491 : vector<8x128xf32>
    %493 = vector.broadcast %103 : f32 to vector<8x128xf32>
    %494 = arith.mulf %167, %493 : vector<8x128xf32>
    %495 = arith.addf %447, %494 : vector<8x128xf32>
    %496 = vector.broadcast %104 : f32 to vector<8x128xf32>
    %497 = arith.mulf %167, %496 : vector<8x128xf32>
    %498 = arith.addf %450, %497 : vector<8x128xf32>
    %499 = vector.broadcast %105 : f32 to vector<8x128xf32>
    %500 = arith.mulf %167, %499 : vector<8x128xf32>
    %501 = arith.addf %453, %500 : vector<8x128xf32>
    %502 = vector.broadcast %106 : f32 to vector<8x128xf32>
    %503 = arith.mulf %167, %502 : vector<8x128xf32>
    %504 = arith.addf %456, %503 : vector<8x128xf32>
    %505 = vector.broadcast %107 : f32 to vector<8x128xf32>
    %506 = arith.mulf %167, %505 : vector<8x128xf32>
    %507 = arith.addf %459, %506 : vector<8x128xf32>
    %508 = vector.broadcast %108 : f32 to vector<8x128xf32>
    %509 = arith.mulf %167, %508 : vector<8x128xf32>
    %510 = arith.addf %462, %509 : vector<8x128xf32>
    %511 = vector.broadcast %109 : f32 to vector<8x128xf32>
    %512 = arith.mulf %167, %511 : vector<8x128xf32>
    %513 = arith.addf %465, %512 : vector<8x128xf32>
    %514 = vector.broadcast %110 : f32 to vector<8x128xf32>
    %515 = arith.mulf %167, %514 : vector<8x128xf32>
    %516 = arith.addf %468, %515 : vector<8x128xf32>
    %517 = vector.broadcast %111 : f32 to vector<8x128xf32>
    %518 = arith.mulf %167, %517 : vector<8x128xf32>
    %519 = arith.addf %471, %518 : vector<8x128xf32>
    %cst = arith.constant 0.000000e+00 : f32
    %520 = vector.broadcast %cst : f32 to vector<8x128xf32>
    %521 = arith.maximumf %474, %520 : vector<8x128xf32>
    %522 = vector.broadcast %128 : f32 to vector<8x128xf32>
    %523 = arith.mulf %521, %522 : vector<8x128xf32>
    %cst_255 = arith.constant 0.000000e+00 : f32
    %524 = vector.broadcast %cst_255 : f32 to vector<8x128xf32>
    %525 = arith.maximumf %477, %524 : vector<8x128xf32>
    %526 = vector.broadcast %129 : f32 to vector<8x128xf32>
    %527 = arith.mulf %525, %526 : vector<8x128xf32>
    %528 = arith.addf %523, %527 : vector<8x128xf32>
    %cst_256 = arith.constant 0.000000e+00 : f32
    %529 = vector.broadcast %cst_256 : f32 to vector<8x128xf32>
    %530 = arith.maximumf %480, %529 : vector<8x128xf32>
    %531 = vector.broadcast %130 : f32 to vector<8x128xf32>
    %532 = arith.mulf %530, %531 : vector<8x128xf32>
    %533 = arith.addf %528, %532 : vector<8x128xf32>
    %cst_257 = arith.constant 0.000000e+00 : f32
    %534 = vector.broadcast %cst_257 : f32 to vector<8x128xf32>
    %535 = arith.maximumf %483, %534 : vector<8x128xf32>
    %536 = vector.broadcast %131 : f32 to vector<8x128xf32>
    %537 = arith.mulf %535, %536 : vector<8x128xf32>
    %538 = arith.addf %533, %537 : vector<8x128xf32>
    %cst_258 = arith.constant 0.000000e+00 : f32
    %539 = vector.broadcast %cst_258 : f32 to vector<8x128xf32>
    %540 = arith.maximumf %486, %539 : vector<8x128xf32>
    %541 = vector.broadcast %132 : f32 to vector<8x128xf32>
    %542 = arith.mulf %540, %541 : vector<8x128xf32>
    %543 = arith.addf %538, %542 : vector<8x128xf32>
    %cst_259 = arith.constant 0.000000e+00 : f32
    %544 = vector.broadcast %cst_259 : f32 to vector<8x128xf32>
    %545 = arith.maximumf %489, %544 : vector<8x128xf32>
    %546 = vector.broadcast %133 : f32 to vector<8x128xf32>
    %547 = arith.mulf %545, %546 : vector<8x128xf32>
    %548 = arith.addf %543, %547 : vector<8x128xf32>
    %cst_260 = arith.constant 0.000000e+00 : f32
    %549 = vector.broadcast %cst_260 : f32 to vector<8x128xf32>
    %550 = arith.maximumf %492, %549 : vector<8x128xf32>
    %551 = vector.broadcast %134 : f32 to vector<8x128xf32>
    %552 = arith.mulf %550, %551 : vector<8x128xf32>
    %553 = arith.addf %548, %552 : vector<8x128xf32>
    %cst_261 = arith.constant 0.000000e+00 : f32
    %554 = vector.broadcast %cst_261 : f32 to vector<8x128xf32>
    %555 = arith.maximumf %495, %554 : vector<8x128xf32>
    %556 = vector.broadcast %135 : f32 to vector<8x128xf32>
    %557 = arith.mulf %555, %556 : vector<8x128xf32>
    %558 = arith.addf %553, %557 : vector<8x128xf32>
    %cst_262 = arith.constant 0.000000e+00 : f32
    %559 = vector.broadcast %cst_262 : f32 to vector<8x128xf32>
    %560 = arith.maximumf %498, %559 : vector<8x128xf32>
    %561 = vector.broadcast %136 : f32 to vector<8x128xf32>
    %562 = arith.mulf %560, %561 : vector<8x128xf32>
    %563 = arith.addf %558, %562 : vector<8x128xf32>
    %cst_263 = arith.constant 0.000000e+00 : f32
    %564 = vector.broadcast %cst_263 : f32 to vector<8x128xf32>
    %565 = arith.maximumf %501, %564 : vector<8x128xf32>
    %566 = vector.broadcast %137 : f32 to vector<8x128xf32>
    %567 = arith.mulf %565, %566 : vector<8x128xf32>
    %568 = arith.addf %563, %567 : vector<8x128xf32>
    %cst_264 = arith.constant 0.000000e+00 : f32
    %569 = vector.broadcast %cst_264 : f32 to vector<8x128xf32>
    %570 = arith.maximumf %504, %569 : vector<8x128xf32>
    %571 = vector.broadcast %138 : f32 to vector<8x128xf32>
    %572 = arith.mulf %570, %571 : vector<8x128xf32>
    %573 = arith.addf %568, %572 : vector<8x128xf32>
    %cst_265 = arith.constant 0.000000e+00 : f32
    %574 = vector.broadcast %cst_265 : f32 to vector<8x128xf32>
    %575 = arith.maximumf %507, %574 : vector<8x128xf32>
    %576 = vector.broadcast %139 : f32 to vector<8x128xf32>
    %577 = arith.mulf %575, %576 : vector<8x128xf32>
    %578 = arith.addf %573, %577 : vector<8x128xf32>
    %cst_266 = arith.constant 0.000000e+00 : f32
    %579 = vector.broadcast %cst_266 : f32 to vector<8x128xf32>
    %580 = arith.maximumf %510, %579 : vector<8x128xf32>
    %581 = vector.broadcast %140 : f32 to vector<8x128xf32>
    %582 = arith.mulf %580, %581 : vector<8x128xf32>
    %583 = arith.addf %578, %582 : vector<8x128xf32>
    %cst_267 = arith.constant 0.000000e+00 : f32
    %584 = vector.broadcast %cst_267 : f32 to vector<8x128xf32>
    %585 = arith.maximumf %513, %584 : vector<8x128xf32>
    %586 = vector.broadcast %141 : f32 to vector<8x128xf32>
    %587 = arith.mulf %585, %586 : vector<8x128xf32>
    %588 = arith.addf %583, %587 : vector<8x128xf32>
    %cst_268 = arith.constant 0.000000e+00 : f32
    %589 = vector.broadcast %cst_268 : f32 to vector<8x128xf32>
    %590 = arith.maximumf %516, %589 : vector<8x128xf32>
    %591 = vector.broadcast %142 : f32 to vector<8x128xf32>
    %592 = arith.mulf %590, %591 : vector<8x128xf32>
    %593 = arith.addf %588, %592 : vector<8x128xf32>
    %cst_269 = arith.constant 0.000000e+00 : f32
    %594 = vector.broadcast %cst_269 : f32 to vector<8x128xf32>
    %595 = arith.maximumf %519, %594 : vector<8x128xf32>
    %596 = vector.broadcast %143 : f32 to vector<8x128xf32>
    %597 = arith.mulf %595, %596 : vector<8x128xf32>
    %598 = arith.addf %593, %597 : vector<8x128xf32>
    %599 = vector.broadcast %144 : f32 to vector<8x128xf32>
    %600 = arith.addf %598, %599 : vector<8x128xf32>
    %601 = arith.index_cast %146 : i32 to index
    %c0_270 = arith.constant 0 : index
    %602 = vector.load %arg6[%601, %c0_270] : memref<8x128xf32, #tpu.memory_space<vmem>>, vector<8x128xf32>
    tpu.vector_store %arg6[%601, %c0_270], %600 {strides = array<i32>} : memref<8x128xf32, #tpu.memory_space<vmem>>, vector<8x128xf32>,
    %c1_i32 = arith.constant 1 : i32
    return
  }
  func.func @transform_0(%arg0: i32) -> (i32, i32, i32) {
    %c0_i32 = arith.constant 0 : i32
    %c0_i32_0 = arith.constant 0 : i32
    %c0_i32_1 = arith.constant 0 : i32
    return %c0_i32, %arg0, %c0_i32_0 : i32, i32, i32
  }
  func.func @transform_1(%arg0: i32) -> (i32, i32) {
    %c0_i32 = arith.constant 0 : i32
    %c0_i32_0 = arith.constant 0 : i32
    %c0_i32_1 = arith.constant 0 : i32
    return %c0_i32, %c0_i32_0 : i32, i32
  }
  func.func @transform_2(%arg0: i32) -> i32 {
    %c0_i32 = arith.constant 0 : i32
    %c0_i32_0 = arith.constant 0 : i32
    return %c0_i32 : i32
  }
  func.func @transform_3(%arg0: i32) -> i32 {
    %c0_i32 = arith.constant 0 : i32
    %c0_i32_0 = arith.constant 0 : i32
    return %c0_i32 : i32
  }
  func.func @transform_4(%arg0: i32) -> i32 {
    %c0_i32 = arith.constant 0 : i32
    %c0_i32_0 = arith.constant 0 : i32
    return %c0_i32 : i32
  }
  func.func @transform_5(%arg0: i32) -> (i32, i32) {
    %c0_i32 = arith.constant 0 : i32
    %c0_i32_0 = arith.constant 0 : i32
    return %arg0, %c0_i32 : i32, i32
  }
}

</mosaic_0001>

<llo_original>
// kernel: tpu_custom_call.1
$region0: #{tpu_custom_call.1}
  #allocation0 [shape = 'u32[]', space=smem, size = 0x4, offset = 0x4, fixed_abs, tag = 'smem constant byte address 0x4 - core index']
  #allocation1 [shape = 'u32[144,128]{1,0:T(1,128)}', space=vmem, size = 0x12000, scoped, tag = 'internal scratch']
  #allocation2 [shape = 'f32[1]{0:T(128)S(6)}', space=smem, size = 0x200, scoped, tag = 'scoped memory for tpu_custom_call.1']
  %s0 = inlined_call_operand.hbm [shape: f32[7,8,128], index: 0, kind: input, shape index: {}]
  %s1 = inlined_call_operand.hbm [shape: f32[7,16], index: 1, kind: input, shape index: {}]
  %s2 = inlined_call_operand.vmem [shape: f32[16], index: 2, kind: input, shape index: {}]
  %s3 = inlined_call_operand.vmem [shape: f32[16], index: 3, kind: input, shape index: {}]
  %s4 = inlined_call_operand.<no memory space> [shape: f32[1], index: 4, kind: input, shape index: {}]
  %s5 = inlined_call_operand.hbm [shape: f32[8,128], index: 5, kind: output, shape index: {}]
  %s6 = sld [smem:[#allocation0]]
  $region46: #{tpu_custom_call.1} parent=0
    _
  %s8 = ssub.s32 1, %s6
  %s9 = scalar_select 0, %s8, %s6
  %10 = sst [smem:[#allocation2]] %s4
  $region1: #{tpu_custom_call.1} parent=0
    #allocation3 [shape = 'u8[28672]{0}', space=vmem, size = 0x7000, scoped, tag = 'input window, operand 0, single buffered']
    #allocation4 [shape = 's32[1]{0}', space=sflag, size = 0x4, scoped, tag = 'scoped memory for tpu_custom_call.1']
    #allocation5 [shape = 's32[1]{0}', space=sflag, size = 0x4, scoped, tag = 'scoped memory for tpu_custom_call.1']
    #allocation6 [shape = 's32[1]{0}', space=sflag, size = 0x4, scoped, tag = 'scoped memory for tpu_custom_call.1']
    #allocation7 [shape = 's32[1]{0}', space=sflag, size = 0x4, scoped, tag = 'scoped memory for tpu_custom_call.1']
    #allocation8 [shape = 'u8[4096]{0}', space=smem, size = 0x1000, scoped, tag = 'input window, operand 1, single buffered']
    #allocation9 [shape = 'u8[512]{0}', space=smem, size = 0x200, scoped, tag = 'input window, operand 2, single buffered']
    #allocation10 [shape = 'u8[512]{0}', space=smem, size = 0x200, scoped, tag = 'input window, operand 3, single buffered']
    #allocation11 [shape = 's32[1]{0}', space=sflag, size = 0x4, scoped, tag = 'scoped memory for tpu_custom_call.1']
    #allocation12 [shape = 'u8[4096]{0}', space=vmem, size = 0x1000, scoped, tag = 'output window, operand 0, single buffered']
    %11 = vsyncpa [#allocation4], 0
    %12 = vsyncpa [#allocation6], 0
    %13 = vsyncpa [#allocation7], 0
    %14 = vsyncpa [#allocation11], 0
    %15 = vsyncpa [#allocation5], 0
    // Predicated region
    $region2: #{tpu_custom_call.1} parent=1 // pred_check
      _
    $region3: #{tpu_custom_call.1} parent=1 // pred_check_branch
      %17 = sbr.rel (0) target = $region5
    $region4: #{tpu_custom_call.1} parent=1 // pred_region
      %s19 = ssub.s32 896, 896
      %20 = vsyncadd [#allocation4], %s19
      %s21 = sshll.u32 [#allocation3], 4
      %s22 = int_to_ptr.vmem [resolvable:$true] %s21
      %27 = dma.hbm_to_vmem [thread:$0]  %s0, 896, %s22, [#allocation4], 128, 128, 8
    $region5: #{tpu_custom_call.1} parent=1 // pred_fallthru
      _
    // Predicated region
    $region6: #{tpu_custom_call.1} parent=1 // pred_check
      _
    $region7: #{tpu_custom_call.1} parent=1 // pred_check_branch
      %29 = sbr.rel (0) target = $region9
    $region8: #{tpu_custom_call.1} parent=1 // pred_region
      %s31 = ssub.s32 128, 128
      %32 = vsyncadd [#allocation6], %s31
      %35 = dma.hbm_to_smem %s1, 128, [#allocation8], [#allocation6]
    $region9: #{tpu_custom_call.1} parent=1 // pred_fallthru
      _
    // Predicated region
    $region10: #{tpu_custom_call.1} parent=1 // pred_check
      _
    $region11: #{tpu_custom_call.1} parent=1 // pred_check_branch
      %37 = sbr.rel (0) target = $region13
    $region12: #{tpu_custom_call.1} parent=1 // pred_region
      %s39 = ssub.s32 16, 16
      %40 = vsyncadd [#allocation7], %s39
      %s42 = sshll.u32 %s2, 4
      %s43 = int_to_ptr.vmem [resolvable:$true] %s42
      %45 = dma.vmem_to_smem %s43, 16, [#allocation9], [#allocation7]
    $region13: #{tpu_custom_call.1} parent=1 // pred_fallthru
      _
    // Predicated region
    $region14: #{tpu_custom_call.1} parent=1 // pred_check
      _
    $region15: #{tpu_custom_call.1} parent=1 // pred_check_branch
      %47 = sbr.rel (0) target = $region17
    $region16: #{tpu_custom_call.1} parent=1 // pred_region
      %s49 = ssub.s32 16, 16
      %50 = vsyncadd [#allocation11], %s49
      %s52 = sshll.u32 %s3, 4
      %s53 = int_to_ptr.vmem [resolvable:$true] %s52
      %55 = dma.vmem_to_smem %s53, 16, [#allocation10], [#allocation11]
    $region17: #{tpu_custom_call.1} parent=1 // pred_fallthru
      _
    // Predicated region
    $region18: #{tpu_custom_call.1} parent=1 // pred_check
      _
    $region19: #{tpu_custom_call.1} parent=1 // pred_check_branch
      %57 = sbr.rel (0) target = $region21
    $region20: #{tpu_custom_call.1} parent=1 // pred_region
      _
    $region21: #{tpu_custom_call.1} parent=1 // pred_fallthru
      _
    // Predicated region
    $region22: #{tpu_custom_call.1} parent=1 // pred_check
      _
    $region23: #{tpu_custom_call.1} parent=1 // pred_check_branch
      %59 = sbr.rel (0) target = $region25
    $region24: #{tpu_custom_call.1} parent=1 // pred_region
      %60 = dma.done [#allocation4], 896
    $region25: #{tpu_custom_call.1} parent=1 // pred_fallthru
      _
    // Predicated region
    $region26: #{tpu_custom_call.1} parent=1 // pred_check
      _
    $region27: #{tpu_custom_call.1} parent=1 // pred_check_branch
      %62 = sbr.rel (0) target = $region29
    $region28: #{tpu_custom_call.1} parent=1 // pred_region
      %63 = dma.done [#allocation6], 128
    $region29: #{tpu_custom_call.1} parent=1 // pred_fallthru
      _
    // Predicated region
    $region30: #{tpu_custom_call.1} parent=1 // pred_check
      _
    $region31: #{tpu_custom_call.1} parent=1 // pred_check_branch
      %65 = sbr.rel (0) target = $region33
    $region32: #{tpu_custom_call.1} parent=1 // pred_region
      %66 = dma.done [#allocation7], 16
    $region33: #{tpu_custom_call.1} parent=1 // pred_fallthru
      _
    // Predicated region
    $region34: #{tpu_custom_call.1} parent=1 // pred_check
      _
    $region35: #{tpu_custom_call.1} parent=1 // pred_check_branch
      %68 = sbr.rel (0) target = $region37
    $region36: #{tpu_custom_call.1} parent=1 // pred_region
      %69 = dma.done [#allocation11], 16
    $region37: #{tpu_custom_call.1} parent=1 // pred_fallthru
      _
    %70 = sfence
    %s71 = sld [smem:[#allocation8]]
    %s72 = sld [smem:[#allocation8 + $0x1]]
    %s73 = sld [smem:[#allocation8 + $0x2]]
    %s74 = sld [smem:[#allocation8 + $0x3]]
    %s75 = sld [smem:[#allocation8 + $0x4]]
    %s76 = sld [smem:[#allocation8 + $0x5]]
    %s77 = sld [smem:[#allocation8 + $0x6]]
    %s78 = sld [smem:[#allocation8 + $0x7]]
    %s79 = sld [smem:[#allocation8 + $0x8]]
    %s80 = sld [smem:[#allocation8 + $0x9]]
    %s81 = sld [smem:[#allocation8 + $0xa]]
    %s82 = sld [smem:[#allocation8 + $0xb]]
    %s83 = sld [smem:[#allocation8 + $0xc]]
    %s84 = sld [smem:[#allocation8 + $0xd]]
    %s85 = sld [smem:[#allocation8 + $0xe]]
    %s86 = sld [smem:[#allocation8 + $0xf]]
    %s87 = sld [smem:[#allocation8 + $0x80]]
    %s88 = sld [smem:[#allocation8 + $0x81]]
    %s89 = sld [smem:[#allocation8 + $0x82]]
    %s90 = sld [smem:[#allocation8 + $0x83]]
    %s91 = sld [smem:[#allocation8 + $0x84]]
    %s92 = sld [smem:[#allocation8 + $0x85]]
    %s93 = sld [smem:[#allocation8 + $0x86]]
    %s94 = sld [smem:[#allocation8 + $0x87]]
    %s95 = sld [smem:[#allocation8 + $0x88]]
    %s96 = sld [smem:[#allocation8 + $0x89]]
    %s97 = sld [smem:[#allocation8 + $0x8a]]
    %s98 = sld [smem:[#allocation8 + $0x8b]]
    %s99 = sld [smem:[#allocation8 + $0x8c]]
    %s100 = sld [smem:[#allocation8 + $0x8d]]
    %s101 = sld [smem:[#allocation8 + $0x8e]]
    %s102 = sld [smem:[#allocation8 + $0x8f]]
    %s103 = sld [smem:[#allocation8 + $0x100]]
    %s104 = sld [smem:[#allocation8 + $0x101]]
    %s105 = sld [smem:[#allocation8 + $0x102]]
    %s106 = sld [smem:[#allocation8 + $0x103]]
    %s107 = sld [smem:[#allocation8 + $0x104]]
    %s108 = sld [smem:[#allocation8 + $0x105]]
    %s109 = sld [smem:[#allocation8 + $0x106]]
    %s110 = sld [smem:[#allocation8 + $0x107]]
    %s111 = sld [smem:[#allocation8 + $0x108]]
    %s112 = sld [smem:[#allocation8 + $0x109]]
    %s113 = sld [smem:[#allocation8 + $0x10a]]
    %s114 = sld [smem:[#allocation8 + $0x10b]]
    %s115 = sld [smem:[#allocation8 + $0x10c]]
    %s116 = sld [smem:[#allocation8 + $0x10d]]
    %s117 = sld [smem:[#allocation8 + $0x10e]]
    %s118 = sld [smem:[#allocation8 + $0x10f]]
    %s119 = sld [smem:[#allocation8 + $0x180]]
    %s120 = sld [smem:[#allocation8 + $0x181]]
    %s121 = sld [smem:[#allocation8 + $0x182]]
    %s122 = sld [smem:[#allocation8 + $0x183]]
    %s123 = sld [smem:[#allocation8 + $0x184]]
    %s124 = sld [smem:[#allocation8 + $0x185]]
    %s125 = sld [smem:[#allocation8 + $0x186]]
    %s126 = sld [smem:[#allocation8 + $0x187]]
    %s127 = sld [smem:[#allocation8 + $0x188]]
    %s128 = sld [smem:[#allocation8 + $0x189]]
    %s129 = sld [smem:[#allocation8 + $0x18a]]
    %s130 = sld [smem:[#allocation8 + $0x18b]]
    %s131 = sld [smem:[#allocation8 + $0x18c]]
    %s132 = sld [smem:[#allocation8 + $0x18d]]
    %s133 = sld [smem:[#allocation8 + $0x18e]]
    %s134 = sld [smem:[#allocation8 + $0x18f]]
    %s135 = sld [smem:[#allocation8 + $0x200]]
    %s136 = sld [smem:[#allocation8 + $0x201]]
    %s137 = sld [smem:[#allocation8 + $0x202]]
    %s138 = sld [smem:[#allocation8 + $0x203]]
    %s139 = sld [smem:[#allocation8 + $0x204]]
    %s140 = sld [smem:[#allocation8 + $0x205]]
    %s141 = sld [smem:[#allocation8 + $0x206]]
    %s142 = sld [smem:[#allocation8 + $0x207]]
    %s143 = sld [smem:[#allocation8 + $0x208]]
    %s144 = sld [smem:[#allocation8 + $0x209]]
    %s145 = sld [smem:[#allocation8 + $0x20a]]
    %s146 = sld [smem:[#allocation8 + $0x20b]]
    %s147 = sld [smem:[#allocation8 + $0x20c]]
    %s148 = sld [smem:[#allocation8 + $0x20d]]
    %s149 = sld [smem:[#allocation8 + $0x20e]]
    %s150 = sld [smem:[#allocation8 + $0x20f]]
    %s151 = sld [smem:[#allocation8 + $0x280]]
    %s152 = sld [smem:[#allocation8 + $0x281]]
    %s153 = sld [smem:[#allocation8 + $0x282]]
    %s154 = sld [smem:[#allocation8 + $0x283]]
    %s155 = sld [smem:[#allocation8 + $0x284]]
    %s156 = sld [smem:[#allocation8 + $0x285]]
    %s157 = sld [smem:[#allocation8 + $0x286]]
    %s158 = sld [smem:[#allocation8 + $0x287]]
    %s159 = sld [smem:[#allocation8 + $0x288]]
    %s160 = sld [smem:[#allocation8 + $0x289]]
    %s161 = sld [smem:[#allocation8 + $0x28a]]
    %s162 = sld [smem:[#allocation8 + $0x28b]]
    %s163 = sld [smem:[#allocation8 + $0x28c]]
    %s164 = sld [smem:[#allocation8 + $0x28d]]
    %s165 = sld [smem:[#allocation8 + $0x28e]]
    %s166 = sld [smem:[#allocation8 + $0x28f]]
    %s167 = sld [smem:[#allocation8 + $0x300]]
    %s168 = sld [smem:[#allocation8 + $0x301]]
    %s169 = sld [smem:[#allocation8 + $0x302]]
    %s170 = sld [smem:[#allocation8 + $0x303]]
    %s171 = sld [smem:[#allocation8 + $0x304]]
    %s172 = sld [smem:[#allocation8 + $0x305]]
    %s173 = sld [smem:[#allocation8 + $0x306]]
    %s174 = sld [smem:[#allocation8 + $0x307]]
    %s175 = sld [smem:[#allocation8 + $0x308]]
    %s176 = sld [smem:[#allocation8 + $0x309]]
    %s177 = sld [smem:[#allocation8 + $0x30a]]
    %s178 = sld [smem:[#allocation8 + $0x30b]]
    %s179 = sld [smem:[#allocation8 + $0x30c]]
    %s180 = sld [smem:[#allocation8 + $0x30d]]
    %s181 = sld [smem:[#allocation8 + $0x30e]]
    %s182 = sld [smem:[#allocation8 + $0x30f]]
    %s183 = sld [smem:[#allocation9]]
    %s184 = sld [smem:[#allocation9 + $0x1]]
    %s185 = sld [smem:[#allocation9 + $0x2]]
    %s186 = sld [smem:[#allocation9 + $0x3]]
    %s187 = sld [smem:[#allocation9 + $0x4]]
    %s188 = sld [smem:[#allocation9 + $0x5]]
    %s189 = sld [smem:[#allocation9 + $0x6]]
    %s190 = sld [smem:[#allocation9 + $0x7]]
    %s191 = sld [smem:[#allocation9 + $0x8]]
    %s192 = sld [smem:[#allocation9 + $0x9]]
    %s193 = sld [smem:[#allocation9 + $0xa]]
    %s194 = sld [smem:[#allocation9 + $0xb]]
    %s195 = sld [smem:[#allocation9 + $0xc]]
    %s196 = sld [smem:[#allocation9 + $0xd]]
    %s197 = sld [smem:[#allocation9 + $0xe]]
    %s198 = sld [smem:[#allocation9 + $0xf]]
    %s199 = sld [smem:[#allocation10]]
    %s200 = sld [smem:[#allocation10 + $0x1]]
    %s201 = sld [smem:[#allocation10 + $0x2]]
    %s202 = sld [smem:[#allocation10 + $0x3]]
    %s203 = sld [smem:[#allocation10 + $0x4]]
    %s204 = sld [smem:[#allocation10 + $0x5]]
    %s205 = sld [smem:[#allocation10 + $0x6]]
    %s206 = sld [smem:[#allocation10 + $0x7]]
    %s207 = sld [smem:[#allocation10 + $0x8]]
    %s208 = sld [smem:[#allocation10 + $0x9]]
    %s209 = sld [smem:[#allocation10 + $0xa]]
    %s210 = sld [smem:[#allocation10 + $0xb]]
    %s211 = sld [smem:[#allocation10 + $0xc]]
    %s212 = sld [smem:[#allocation10 + $0xd]]
    %s213 = sld [smem:[#allocation10 + $0xe]]
    %s214 = sld [smem:[#allocation10 + $0xf]]
    %s215 = sld [smem:[#allocation2]]
    %v216 = vld [vmem:[#allocation3] sm:$0xff]
    %s217 = sadd.s32 0, 8
    %s218 = scalar_lea.vmem [#allocation3], %s217
    %v219 = vld [vmem:[%s218] sm:$0xff]
    %s220 = sadd.s32 0, 16
    %s221 = scalar_lea.vmem [#allocation3], %s220
    %v222 = vld [vmem:[%s221] sm:$0xff]
    %s223 = sadd.s32 0, 24
    %s224 = scalar_lea.vmem [#allocation3], %s223
    %v225 = vld [vmem:[%s224] sm:$0xff]
    %s226 = sadd.s32 0, 32
    %s227 = scalar_lea.vmem [#allocation3], %s226
    %v228 = vld [vmem:[%s227] sm:$0xff]
    %s229 = sadd.s32 0, 40
    %s230 = scalar_lea.vmem [#allocation3], %s229
    %v231 = vld [vmem:[%s230] sm:$0xff]
    %s232 = sadd.s32 0, 48
    %s233 = scalar_lea.vmem [#allocation3], %s232
    %v234 = vld [vmem:[%s233] sm:$0xff]
    %v235 = vstv %s71
    %v236 = vmul.f32 %v216, %v235
    %v237 = vstv %s183
    %v238 = vadd.f32 %v236, %v237
    %v239 = vstv %s72
    %v240 = vmul.f32 %v216, %v239
    %v241 = vstv %s184
    %v242 = vadd.f32 %v240, %v241
    %v243 = vstv %s73
    %v244 = vmul.f32 %v216, %v243
    %v245 = vstv %s185
    %v246 = vadd.f32 %v244, %v245
    %v247 = vstv %s74
    %v248 = vmul.f32 %v216, %v247
    %v249 = vstv %s186
    %v250 = vadd.f32 %v248, %v249
    %v251 = vstv %s75
    %v252 = vmul.f32 %v216, %v251
    %v253 = vstv %s187
    %v254 = vadd.f32 %v252, %v253
    %v255 = vstv %s76
    %v256 = vmul.f32 %v216, %v255
    %v257 = vstv %s188
    %v258 = vadd.f32 %v256, %v257
    %v259 = vstv %s77
    %v260 = vmul.f32 %v216, %v259
    %v261 = vstv %s189
    %v262 = vadd.f32 %v260, %v261
    %v263 = vstv %s78
    %v264 = vmul.f32 %v216, %v263
    %v265 = vstv %s190
    %v266 = vadd.f32 %v264, %v265
    %v267 = vstv %s79
    %v268 = vmul.f32 %v216, %v267
    %v269 = vstv %s191
    %v270 = vadd.f32 %v268, %v269
    %v271 = vstv %s80
    %v272 = vmul.f32 %v216, %v271
    %v273 = vstv %s192
    %v274 = vadd.f32 %v272, %v273
    %v275 = vstv %s81
    %v276 = vmul.f32 %v216, %v275
    %v277 = vstv %s193
    %v278 = vadd.f32 %v276, %v277
    %v279 = vstv %s82
    %v280 = vmul.f32 %v216, %v279
    %v281 = vstv %s194
    %v282 = vadd.f32 %v280, %v281
    %v283 = vstv %s83
    %v284 = vmul.f32 %v216, %v283
    %v285 = vstv %s195
    %v286 = vadd.f32 %v284, %v285
    %v287 = vstv %s84
    %v288 = vmul.f32 %v216, %v287
    %v289 = vstv %s196
    %v290 = vadd.f32 %v288, %v289
    %v291 = vstv %s85
    %v292 = vmul.f32 %v216, %v291
    %v293 = vstv %s197
    %v294 = vadd.f32 %v292, %v293
    %v295 = vstv %s86
    %v296 = vmul.f32 %v216, %v295
    %v297 = vstv %s198
    %v298 = vadd.f32 %v296, %v297
    %v299 = vstv %s87
    %v300 = vmul.f32 %v219, %v299
    %v301 = vadd.f32 %v238, %v300
    %v302 = vstv %s88
    %v303 = vmul.f32 %v219, %v302
    %v304 = vadd.f32 %v242, %v303
    %v305 = vstv %s89
    %v306 = vmul.f32 %v219, %v305
    %v307 = vadd.f32 %v246, %v306
    %v308 = vstv %s90
    %v309 = vmul.f32 %v219, %v308
    %v310 = vadd.f32 %v250, %v309
    %v311 = vstv %s91
    %v312 = vmul.f32 %v219, %v311
    %v313 = vadd.f32 %v254, %v312
    %v314 = vstv %s92
    %v315 = vmul.f32 %v219, %v314
    %v316 = vadd.f32 %v258, %v315
    %v317 = vstv %s93
    %v318 = vmul.f32 %v219, %v317
    %v319 = vadd.f32 %v262, %v318
    %v320 = vstv %s94
    %v321 = vmul.f32 %v219, %v320
    %v322 = vadd.f32 %v266, %v321
    %v323 = vstv %s95
    %v324 = vmul.f32 %v219, %v323
    %v325 = vadd.f32 %v270, %v324
    %v326 = vstv %s96
    %v327 = vmul.f32 %v219, %v326
    %v328 = vadd.f32 %v274, %v327
    %v329 = vstv %s97
    %v330 = vmul.f32 %v219, %v329
    %v331 = vadd.f32 %v278, %v330
    %v332 = vstv %s98
    %v333 = vmul.f32 %v219, %v332
    %v334 = vadd.f32 %v282, %v333
    %v335 = vstv %s99
    %v336 = vmul.f32 %v219, %v335
    %v337 = vadd.f32 %v286, %v336
    %v338 = vstv %s100
    %v339 = vmul.f32 %v219, %v338
    %v340 = vadd.f32 %v290, %v339
    %v341 = vstv %s101
    %v342 = vmul.f32 %v219, %v341
    %v343 = vadd.f32 %v294, %v342
    %v344 = vstv %s102
    %v345 = vmul.f32 %v219, %v344
    %v346 = vadd.f32 %v298, %v345
    %v347 = vstv %s103
    %v348 = vmul.f32 %v222, %v347
    %v349 = vadd.f32 %v301, %v348
    %v350 = vstv %s104
    %v351 = vmul.f32 %v222, %v350
    %v352 = vadd.f32 %v304, %v351
    %v353 = vstv %s105
    %v354 = vmul.f32 %v222, %v353
    %v355 = vadd.f32 %v307, %v354
    %v356 = vstv %s106
    %v357 = vmul.f32 %v222, %v356
    %v358 = vadd.f32 %v310, %v357
    %v359 = vstv %s107
    %v360 = vmul.f32 %v222, %v359
    %v361 = vadd.f32 %v313, %v360
    %v362 = vstv %s108
    %v363 = vmul.f32 %v222, %v362
    %v364 = vadd.f32 %v316, %v363
    %v365 = vstv %s109
    %v366 = vmul.f32 %v222, %v365
    %v367 = vadd.f32 %v319, %v366
    %v368 = vstv %s110
    %v369 = vmul.f32 %v222, %v368
    %v370 = vadd.f32 %v322, %v369
    %v371 = vstv %s111
    %v372 = vmul.f32 %v222, %v371
    %v373 = vadd.f32 %v325, %v372
    %v374 = vstv %s112
    %v375 = vmul.f32 %v222, %v374
    %v376 = vadd.f32 %v328, %v375
    %v377 = vstv %s113
    %v378 = vmul.f32 %v222, %v377
    %v379 = vadd.f32 %v331, %v378
    %v380 = vstv %s114
    %v381 = vmul.f32 %v222, %v380
    %v382 = vadd.f32 %v334, %v381
    %v383 = vstv %s115
    %v384 = vmul.f32 %v222, %v383
    %v385 = vadd.f32 %v337, %v384
    %v386 = vstv %s116
    %v387 = vmul.f32 %v222, %v386
    %v388 = vadd.f32 %v340, %v387
    %v389 = vstv %s117
    %v390 = vmul.f32 %v222, %v389
    %v391 = vadd.f32 %v343, %v390
    %v392 = vstv %s118
    %v393 = vmul.f32 %v222, %v392
    %v394 = vadd.f32 %v346, %v393
    %v395 = vstv %s119
    %v396 = vmul.f32 %v225, %v395
    %v397 = vadd.f32 %v349, %v396
    %v398 = vstv %s120
    %v399 = vmul.f32 %v225, %v398
    %v400 = vadd.f32 %v352, %v399
    %v401 = vstv %s121
    %v402 = vmul.f32 %v225, %v401
    %v403 = vadd.f32 %v355, %v402
    %v404 = vstv %s122
    %v405 = vmul.f32 %v225, %v404
    %v406 = vadd.f32 %v358, %v405
    %v407 = vstv %s123
    %v408 = vmul.f32 %v225, %v407
    %v409 = vadd.f32 %v361, %v408
    %v410 = vstv %s124
    %v411 = vmul.f32 %v225, %v410
    %v412 = vadd.f32 %v364, %v411
    %v413 = vstv %s125
    %v414 = vmul.f32 %v225, %v413
    %v415 = vadd.f32 %v367, %v414
    %v416 = vstv %s126
    %v417 = vmul.f32 %v225, %v416
    %v418 = vadd.f32 %v370, %v417
    %v419 = vstv %s127
    %v420 = vmul.f32 %v225, %v419
    %v421 = vadd.f32 %v373, %v420
    %v422 = vstv %s128
    %v423 = vmul.f32 %v225, %v422
    %v424 = vadd.f32 %v376, %v423
    %v425 = vstv %s129
    %v426 = vmul.f32 %v225, %v425
    %v427 = vadd.f32 %v379, %v426
    %v428 = vstv %s130
    %v429 = vmul.f32 %v225, %v428
    %v430 = vadd.f32 %v382, %v429
    %v431 = vstv %s131
    %v432 = vmul.f32 %v225, %v431
    %v433 = vadd.f32 %v385, %v432
    %v434 = vstv %s132
    %v435 = vmul.f32 %v225, %v434
    %v436 = vadd.f32 %v388, %v435
    %v437 = vstv %s133
    %v438 = vmul.f32 %v225, %v437
    %v439 = vadd.f32 %v391, %v438
    %v440 = vstv %s134
    %v441 = vmul.f32 %v225, %v440
    %v442 = vadd.f32 %v394, %v441
    %v443 = vstv %s135
    %v444 = vmul.f32 %v228, %v443
    %v445 = vadd.f32 %v397, %v444
    %v446 = vstv %s136
    %v447 = vmul.f32 %v228, %v446
    %v448 = vadd.f32 %v400, %v447
    %v449 = vstv %s137
    %v450 = vmul.f32 %v228, %v449
    %v451 = vadd.f32 %v403, %v450
    %v452 = vstv %s138
    %v453 = vmul.f32 %v228, %v452
    %v454 = vadd.f32 %v406, %v453
    %v455 = vstv %s139
    %v456 = vmul.f32 %v228, %v455
    %v457 = vadd.f32 %v409, %v456
    %v458 = vstv %s140
    %v459 = vmul.f32 %v228, %v458
    %v460 = vadd.f32 %v412, %v459
    %v461 = vstv %s141
    %v462 = vmul.f32 %v228, %v461
    %v463 = vadd.f32 %v415, %v462
    %v464 = vstv %s142
    %v465 = vmul.f32 %v228, %v464
    %v466 = vadd.f32 %v418, %v465
    %v467 = vstv %s143
    %v468 = vmul.f32 %v228, %v467
    %v469 = vadd.f32 %v421, %v468
    %v470 = vstv %s144
    %v471 = vmul.f32 %v228, %v470
    %v472 = vadd.f32 %v424, %v471
    %v473 = vstv %s145
    %v474 = vmul.f32 %v228, %v473
    %v475 = vadd.f32 %v427, %v474
    %v476 = vstv %s146
    %v477 = vmul.f32 %v228, %v476
    %v478 = vadd.f32 %v430, %v477
    %v479 = vstv %s147
    %v480 = vmul.f32 %v228, %v479
    %v481 = vadd.f32 %v433, %v480
    %v482 = vstv %s148
    %v483 = vmul.f32 %v228, %v482
    %v484 = vadd.f32 %v436, %v483
    %v485 = vstv %s149
    %v486 = vmul.f32 %v228, %v485
    %v487 = vadd.f32 %v439, %v486
    %v488 = vstv %s150
    %v489 = vmul.f32 %v228, %v488
    %v490 = vadd.f32 %v442, %v489
    %v491 = vstv %s151
    %v492 = vmul.f32 %v231, %v491
    %v493 = vadd.f32 %v445, %v492
    %v494 = vstv %s152
    %v495 = vmul.f32 %v231, %v494
    %v496 = vadd.f32 %v448, %v495
    %v497 = vstv %s153
    %v498 = vmul.f32 %v231, %v497
    %v499 = vadd.f32 %v451, %v498
    %v500 = vstv %s154
    %v501 = vmul.f32 %v231, %v500
    %v502 = vadd.f32 %v454, %v501
    %v503 = vstv %s155
    %v504 = vmul.f32 %v231, %v503
    %v505 = vadd.f32 %v457, %v504
    %v506 = vstv %s156
    %v507 = vmul.f32 %v231, %v506
    %v508 = vadd.f32 %v460, %v507
    %v509 = vstv %s157
    %v510 = vmul.f32 %v231, %v509
    %v511 = vadd.f32 %v463, %v510
    %v512 = vstv %s158
    %v513 = vmul.f32 %v231, %v512
    %v514 = vadd.f32 %v466, %v513
    %v515 = vstv %s159
    %v516 = vmul.f32 %v231, %v515
    %v517 = vadd.f32 %v469, %v516
    %v518 = vstv %s160
    %v519 = vmul.f32 %v231, %v518
    %v520 = vadd.f32 %v472, %v519
    %v521 = vstv %s161
    %v522 = vmul.f32 %v231, %v521
    %v523 = vadd.f32 %v475, %v522
    %v524 = vstv %s162
    %v525 = vmul.f32 %v231, %v524
    %v526 = vadd.f32 %v478, %v525
    %v527 = vstv %s163
    %v528 = vmul.f32 %v231, %v527
    %v529 = vadd.f32 %v481, %v528
    %v530 = vstv %s164
    %v531 = vmul.f32 %v231, %v530
    %v532 = vadd.f32 %v484, %v531
    %v533 = vstv %s165
    %v534 = vmul.f32 %v231, %v533
    %v535 = vadd.f32 %v487, %v534
    %v536 = vstv %s166
    %v537 = vmul.f32 %v231, %v536
    %v538 = vadd.f32 %v490, %v537
    %v539 = vstv %s167
    %v540 = vmul.f32 %v234, %v539
    %v541 = vadd.f32 %v493, %v540
    %v542 = vstv %s168
    %v543 = vmul.f32 %v234, %v542
    %v544 = vadd.f32 %v496, %v543
    %v545 = vstv %s169
    %v546 = vmul.f32 %v234, %v545
    %v547 = vadd.f32 %v499, %v546
    %v548 = vstv %s170
    %v549 = vmul.f32 %v234, %v548
    %v550 = vadd.f32 %v502, %v549
    %v551 = vstv %s171
    %v552 = vmul.f32 %v234, %v551
    %v553 = vadd.f32 %v505, %v552
    %v554 = vstv %s172
    %v555 = vmul.f32 %v234, %v554
    %v556 = vadd.f32 %v508, %v555
    %v557 = vstv %s173
    %v558 = vmul.f32 %v234, %v557
    %v559 = vadd.f32 %v511, %v558
    %v560 = vstv %s174
    %v561 = vmul.f32 %v234, %v560
    %v562 = vadd.f32 %v514, %v561
    %v563 = vstv %s175
    %v564 = vmul.f32 %v234, %v563
    %v565 = vadd.f32 %v517, %v564
    %v566 = vstv %s176
    %v567 = vmul.f32 %v234, %v566
    %v568 = vadd.f32 %v520, %v567
    %v569 = vstv %s177
    %v570 = vmul.f32 %v234, %v569
    %v571 = vadd.f32 %v523, %v570
    %v572 = vstv %s178
    %v573 = vmul.f32 %v234, %v572
    %v574 = vadd.f32 %v526, %v573
    %v575 = vstv %s179
    %v576 = vmul.f32 %v234, %v575
    %v577 = vadd.f32 %v529, %v576
    %v578 = vstv %s180
    %v579 = vmul.f32 %v234, %v578
    %v580 = vadd.f32 %v532, %v579
    %v581 = vstv %s181
    %v582 = vmul.f32 %v234, %v581
    %v583 = vadd.f32 %v535, %v582
    %v584 = vstv %s182
    %v585 = vmul.f32 %v234, %v584
    %v586 = vadd.f32 %v538, %v585
    %v587 = vmax.f32 %v541, 0.0
    %v588 = vstv %s199
    %v589 = vmul.f32 %v587, %v588
    %v590 = vmax.f32 %v544, 0.0
    %v591 = vstv %s200
    %v592 = vmul.f32 %v590, %v591
    %v593 = vadd.f32 %v589, %v592
    %v594 = vmax.f32 %v547, 0.0
    %v595 = vstv %s201
    %v596 = vmul.f32 %v594, %v595
    %v597 = vadd.f32 %v593, %v596
    %v598 = vmax.f32 %v550, 0.0
    %v599 = vstv %s202
    %v600 = vmul.f32 %v598, %v599
    %v601 = vadd.f32 %v597, %v600
    %v602 = vmax.f32 %v553, 0.0
    %v603 = vstv %s203
    %v604 = vmul.f32 %v602, %v603
    %v605 = vadd.f32 %v601, %v604
    %v606 = vmax.f32 %v556, 0.0
    %v607 = vstv %s204
    %v608 = vmul.f32 %v606, %v607
    %v609 = vadd.f32 %v605, %v608
    %v610 = vmax.f32 %v559, 0.0
    %v611 = vstv %s205
    %v612 = vmul.f32 %v610, %v611
    %v613 = vadd.f32 %v609, %v612
    %v614 = vmax.f32 %v562, 0.0
    %v615 = vstv %s206
    %v616 = vmul.f32 %v614, %v615
    %v617 = vadd.f32 %v613, %v616
    %v618 = vmax.f32 %v565, 0.0
    %v619 = vstv %s207
    %v620 = vmul.f32 %v618, %v619
    %v621 = vadd.f32 %v617, %v620
    %v622 = vmax.f32 %v568, 0.0
    %v623 = vstv %s208
    %v624 = vmul.f32 %v622, %v623
    %v625 = vadd.f32 %v621, %v624
    %v626 = vmax.f32 %v571, 0.0
    %v627 = vstv %s209
    %v628 = vmul.f32 %v626, %v627
    %v629 = vadd.f32 %v625, %v628
    %v630 = vmax.f32 %v574, 0.0
    %v631 = vstv %s210
    %v632 = vmul.f32 %v630, %v631
    %v633 = vadd.f32 %v629, %v632
    %v634 = vmax.f32 %v577, 0.0
    %v635 = vstv %s211
    %v636 = vmul.f32 %v634, %v635
    %v637 = vadd.f32 %v633, %v636
    %v638 = vmax.f32 %v580, 0.0
    %v639 = vstv %s212
    %v640 = vmul.f32 %v638, %v639
    %v641 = vadd.f32 %v637, %v640
    %v642 = vmax.f32 %v583, 0.0
    %v643 = vstv %s213
    %v644 = vmul.f32 %v642, %v643
    %v645 = vadd.f32 %v641, %v644
    %v646 = vmax.f32 %v586, 0.0
    %v647 = vstv %s214
    %v648 = vmul.f32 %v646, %v647
    %v649 = vadd.f32 %v645, %v648
    %v650 = vstv %s215
    %v651 = vadd.f32 %v649, %v650
    %652 = vst [vmem:[#allocation12] sm:$0xff] %v651
    // Predicated region
    $region38: #{tpu_custom_call.1} parent=1 // pred_check
      _
    $region39: #{tpu_custom_call.1} parent=1 // pred_check_branch
      %654 = sbr.rel (0) target = $region41
    $region40: #{tpu_custom_call.1} parent=1 // pred_region
      %s656 = ssub.s32 128, 128
      %657 = vsyncadd [#allocation5], %s656
      %s659 = sshll.u32 [#allocation12], 4
      %s660 = int_to_ptr.vmem [resolvable:$true] %s659
      %662 = dma.vmem_to_hbm [thread:$0]  %s660, 128, %s5, [#allocation5]
    $region41: #{tpu_custom_call.1} parent=1 // pred_fallthru
      _
    // Predicated region
    $region42: #{tpu_custom_call.1} parent=1 // pred_check
      _
    $region43: #{tpu_custom_call.1} parent=1 // pred_check_branch
      %664 = sbr.rel (0) target = $region45
    $region44: #{tpu_custom_call.1} parent=1 // pred_region
      %665 = dma.done [#allocation5], 128
    $region45: #{tpu_custom_call.1} parent=1 // pred_fallthru
      _
    %666 = vsyncpa [#allocation4], 1
    %667 = vsyncpa [#allocation5], 1
    %668 = vsyncpa [#allocation6], 1
    %669 = vsyncpa [#allocation7], 1
    %670 = vsyncpa [#allocation11], 1

</llo_original>
